<compile_context>
chip_gen: v7x
topology: tpu7x:2x2x1
jax: 0.10.0
libtpu: 0.0.40
codegen_flags: <defaults>
</compile_context>

<pallas_src>
import math

import jax
import jax.numpy as jnp
from jax.experimental import pallas as pl
from jax.experimental.pallas import tpu as pltpu


M_LATENT = 8          # latent dim of z
H = 512               # hidden width
OUT = 784             # 28 * 28  (= 6*128 + 16: only the last 16 lanes store masked)
FIXED_VARIANCE = 0.1


def _round_up(x, m):
    return ((x + m - 1) // m) * m


def _default_tb():
    """Per-generation batch tile: 1024 on v5/v6 (128 MiB VMEM, amortize the
    per-step pipeline overhead), 512 elsewhere (v7x: 64 MiB VMEM per TC)."""
    try:
        kind = jax.devices()[0].device_kind.lower()
        if "v5" in kind or "v6" in kind:
            return 1024
    except Exception:
        pass
    return 512


def _decoder_mlp_kernel(z_ref, w1_ref, b1_ref, w2_ref, b2_ref, w3_ref, b3_ref,
                        out_ref):
    """Decoder MLP for one batch tile. Weights are bf16 (VMEM-resident across
    the whole grid), biases and accumulation are f32."""
    z = z_ref[...].astype(jnp.bfloat16)                                # (TB, M)

    # Linear(M, 512) + ReLU
    h1 = jnp.dot(z, w1_ref[...], preferred_element_type=jnp.float32)
    h1 = jnp.maximum(h1 + b1_ref[...], 0.0)                            # (TB, 512) f32

    # Linear(512, 512) + ReLU
    h2 = jnp.dot(h1.astype(jnp.bfloat16), w2_ref[...],
                 preferred_element_type=jnp.float32)
    h2 = jnp.maximum(h2 + b2_ref[...], 0.0)                            # (TB, 512) f32

    # Linear(512, 784) -- output full 784 columns, no padding / wrapper slice
    o = jnp.dot(h2.astype(jnp.bfloat16), w3_ref[...],
                preferred_element_type=jnp.float32)
    out_ref[...] = (o + b3_ref[...]).astype(out_ref.dtype)             # (TB, 784)


def prepare_kernel_params(params):
    """Cast weights to bf16 (halves weight DMA, doubles MXU rate).
    Biases stay f32."""
    w1, b1, w2, b2, w3, b3 = params
    return (w1.astype(jnp.bfloat16), b1,
            w2.astype(jnp.bfloat16), b2,
            w3.astype(jnp.bfloat16), b3)


def _choose_tb(batch, tb_max):
    """Pick a 16-row-aligned batch tile. For large batches use tb_max; for
    mid-size batches split into (at least) two tiles so both v7x TensorCores
    get work; tiny batches round up to 16 sublanes (packed bf16 vregs)."""
    b16 = _round_up(max(batch, 1), 16)
    if b16 >= 2 * tb_max:
        return tb_max
    if b16 >= 32:
        return _round_up(pl.cdiv(b16, 2), 16)
    return 16


def decoder_mlp(z, kparams, tb=None, out_dtype=jnp.float32):
    """Run the decoder MLP with a batch-tiled Pallas call.

    z: (B, M) f32.  kparams: output of prepare_kernel_params.
    Returns (B, OUT) in out_dtype (f32 by default; pass jnp.bfloat16 to halve
    output writeback on writeback-bound chips if reduced precision is OK)."""
    w1, b1, w2, b2, w3, b3 = kparams
    B, M = z.shape

    tb_max = _default_tb() if tb is None else tb
    TB = _choose_tb(B, tb_max)
    B_pad = _round_up(B, TB)
    if B_pad != B:
        z = jnp.pad(z, ((0, B_pad - B), (0, 0)))

    # Constant index_map -> weights/biases stay VMEM-resident across grid steps.
    const = lambda shape: pl.BlockSpec(shape, lambda i: (0, 0))

    out = pl.pallas_call(
        _decoder_mlp_kernel,
        out_shape=jax.ShapeDtypeStruct((B_pad, OUT), out_dtype),
        grid=(B_pad // TB,),
        in_specs=[
            pl.BlockSpec((TB, M), lambda i: (i, 0)),
            const(w1.shape), const(b1.shape),
            const(w2.shape), const(b2.shape),
            const(w3.shape), const(b3.shape),
        ],
        out_specs=pl.BlockSpec((TB, OUT), lambda i: (i, 0)),
        compiler_params=pltpu.CompilerParams(
            dimension_semantics=("parallel",),
            vmem_limit_bytes=48 * 1024 * 1024),
    )(z, w1, b1, w2, b2, w3, b3)

    if B_pad != B:
        out = out[:B]
    return out


def init_params(key, m=M_LATENT):
    """Deterministic init mimicking torch.nn.Linear default
    (uniform +/- 1/sqrt(fan_in)). Weights are stored (in_features, out_features),
    biases as (1, fan_out) f32."""
    def linear(k, fan_in, fan_out):
        kw, kb = jax.random.split(k)
        bound = 1.0 / math.sqrt(fan_in)
        w = jax.random.uniform(kw, (fan_in, fan_out), jnp.float32, -bound, bound)
        b = jax.random.uniform(kb, (1, fan_out), jnp.float32, -bound, bound)
        return w, b

    k1, k2, k3 = jax.random.split(key, 3)
    w1, b1 = linear(k1, m, H)
    w2, b2 = linear(k2, H, H)
    w3, b3 = linear(k3, H, OUT)
    return (w1, b1, w2, b2, w3, b3)


def multivariate_gaussian_decoder_fixed_variance(z, kparams,
                                                 fixed_variance=FIXED_VARIANCE):
    """Forward pass. Returns (mean, std):
       mean: (..., 28, 28) Gaussian location
       std:  scalar, exp(log(sqrt(fixed_variance)))
    which parameterize td.Independent(td.Normal(mean, std), 2).
    Supports z of shape (B, M) or (num_samples, B, M) like the torch module."""
    # TODO(synk): the torch module returns a torch.distributions object; here we
    # return its (mean, std) parameters instead.
    log_std = jnp.log(jnp.sqrt(jnp.float32(fixed_variance)))
    std = jnp.exp(log_std)

    if z.ndim == 3:
        num_samples, batch_size, m = z.shape
        flat = decoder_mlp(z.reshape(num_samples * batch_size, m), kparams)
        mean = flat.reshape(num_samples, batch_size, 28, 28)
    else:
        batch_size = z.shape[0]
        flat = decoder_mlp(z, kparams)
        mean = flat.reshape(batch_size, 28, 28)
    return mean, std


def _reference_mlp_bf16(z, kparams):
    """Plain-JAX reference using the same bf16-weight / f32-accumulate recipe."""
    w1, b1, w2, b2, w3, b3 = kparams
    h1 = jnp.maximum(
        jnp.dot(z.astype(jnp.bfloat16), w1, preferred_element_type=jnp.float32) + b1, 0.0)
    h2 = jnp.maximum(
        jnp.dot(h1.astype(jnp.bfloat16), w2, preferred_element_type=jnp.float32) + b2, 0.0)
    o = jnp.dot(h2.astype(jnp.bfloat16), w3, preferred_element_type=jnp.float32) + b3
    return o


def _reference_mlp_f32(z, params):
    w1, b1, w2, b2, w3, b3 = params
    h1 = jnp.maximum(z @ w1 + b1, 0.0)
    h2 = jnp.maximum(h1 @ w2 + b2, 0.0)
    return h2 @ w3 + b3


if __name__ == "__main__":
    key = jax.random.PRNGKey(0)
    kp, kz = jax.random.split(key)

    params = init_params(kp, M_LATENT)
    kparams = prepare_kernel_params(params)

    batch = 2
    z = jax.random.normal(kz, (batch, M_LATENT), jnp.float32)

    mean, std = multivariate_gaussian_decoder_fixed_variance(z, kparams)
    mean = jax.block_until_ready(mean)

    assert mean.shape == (batch, 28, 28), mean.shape
    assert mean.dtype == jnp.float32

    # tight check against a bf16-weight reference (same quantization recipe)
    ref_bf16 = _reference_mlp_bf16(z, kparams).reshape(batch, 28, 28)
    err_bf16 = float(jnp.max(jnp.abs(mean - ref_bf16)))
    assert err_bf16 < 2e-3, f"max abs err vs bf16 ref {err_bf16}"

    # loose sanity check against the full-f32 reference
    ref_f32 = _reference_mlp_f32(z, params).reshape(batch, 28, 28)
    err_f32 = float(jnp.max(jnp.abs(mean - ref_f32)))
    assert err_f32 < 5e-2, f"max abs err vs f32 ref {err_f32}"

    assert abs(float(std) - math.sqrt(FIXED_VARIANCE)) < 1e-6

    # 3-D (num_samples, batch, M) path, as supported by the torch module
    z3 = jax.random.normal(jax.random.PRNGKey(1), (3, batch, M_LATENT), jnp.float32)
    mean3, _ = multivariate_gaussian_decoder_fixed_variance(z3, kparams)
    mean3 = jax.block_until_ready(mean3)
    assert mean3.shape == (3, batch, 28, 28), mean3.shape
    ref3 = _reference_mlp_bf16(z3.reshape(-1, M_LATENT), kparams).reshape(3, batch, 28, 28)
    err3 = float(jnp.max(jnp.abs(mean3 - ref3)))
    assert err3 < 2e-3, f"max abs err (3-D path) vs bf16 ref {err3}"

    # exercise a multi-tile grid (>=2 grid steps, batch padding path)
    zb = jax.random.normal(jax.random.PRNGKey(2), (300, M_LATENT), jnp.float32)
    out_b = jax.block_until_ready(decoder_mlp(zb, kparams))
    assert out_b.shape == (300, OUT), out_b.shape
    ref_b = _reference_mlp_bf16(zb, kparams)
    err_b = float(jnp.max(jnp.abs(out_b - ref_b)))
    assert err_b < 2e-3, f"max abs err (multi-tile) vs bf16 ref {err_b}"

    print("KERNEL_OK")
</pallas_src>

<mosaic_0001>
module attributes {stable_mosaic.version = 11 : i64} {
  func.func @_decoder_mlp_kernel(%arg0: i32, %arg1: memref<16x8xf32, #tpu.memory_space<vmem>>, %arg2: memref<8x512xbf16, #tpu.memory_space<vmem>>, %arg3: memref<1x512xf32, #tpu.memory_space<vmem>>, %arg4: memref<512x512xbf16, #tpu.memory_space<vmem>>, %arg5: memref<1x512xf32, #tpu.memory_space<vmem>>, %arg6: memref<512x784xbf16, #tpu.memory_space<vmem>>, %arg7: memref<1x784xf32, #tpu.memory_space<vmem>>, %arg8: memref<16x784xf32, #tpu.memory_space<vmem>>) attributes {dimension_semantics = [#tpu.dimension_semantics<parallel>], iteration_bounds = array<i64: 1>, scalar_prefetch = 0 : i64, scratch_operands = 0 : i64, tpu.core_type = #tpu.core_type<tc>, window_params = [{transform_indices = @transform_0, window_bounds = array<i64: 16, 8>}, {pipeline_mode = #tpu.pipeline_mode<synchronous>, transform_indices = @transform_1, window_bounds = array<i64: 8, 512>}, {pipeline_mode = #tpu.pipeline_mode<synchronous>, transform_indices = @transform_2, window_bounds = array<i64: 1, 512>}, {pipeline_mode = #tpu.pipeline_mode<synchronous>, transform_indices = @transform_3, window_bounds = array<i64: 512, 512>}, {pipeline_mode = #tpu.pipeline_mode<synchronous>, transform_indices = @transform_4, window_bounds = array<i64: 1, 512>}, {pipeline_mode = #tpu.pipeline_mode<synchronous>, transform_indices = @transform_5, window_bounds = array<i64: 512, 784>}, {pipeline_mode = #tpu.pipeline_mode<synchronous>, transform_indices = @transform_6, window_bounds = array<i64: 1, 784>}, {transform_indices = @transform_7, window_bounds = array<i64: 16, 784>}]} {
    %c0 = arith.constant 0 : index
    %c0_0 = arith.constant 0 : index
    %0 = vector.load %arg1[%c0, %c0_0] : memref<16x8xf32, #tpu.memory_space<vmem>>, vector<16x8xf32>
    %1 = arith.truncf %0 : vector<16x8xf32> to vector<16x8xbf16>
    %c0_1 = arith.constant 0 : index
    %c0_2 = arith.constant 0 : index
    %2 = vector.load %arg2[%c0_1, %c0_2] : memref<8x512xbf16, #tpu.memory_space<vmem>>, vector<8x512xbf16>
    %cst = arith.constant dense<0.000000e+00> : vector<16x512xf32>
    %3 = tpu.matmul %1, %2, %cst {dimension_numbers = #tpu.dot_dimension_numbers<[1], [0], [0], [1], [0, 0, 1, 1], [], []>} : vector<16x8xbf16>, vector<8x512xbf16>, vector<16x512xf32> -> vector<16x512xf32>
    %c0_3 = arith.constant 0 : index
    %c0_4 = arith.constant 0 : index
    %4 = vector.load %arg3[%c0_3, %c0_4] : memref<1x512xf32, #tpu.memory_space<vmem>>, vector<1x512xf32>
    %5 = vector.broadcast %4 : vector<1x512xf32> to vector<16x512xf32>
    %6 = arith.addf %3, %5 : vector<16x512xf32>
    %cst_5 = arith.constant 0.000000e+00 : f32
    %7 = vector.broadcast %cst_5 : f32 to vector<16x512xf32>
    %8 = arith.maximumf %6, %7 : vector<16x512xf32>
    %9 = arith.truncf %8 : vector<16x512xf32> to vector<16x512xbf16>
    %c0_6 = arith.constant 0 : index
    %c0_7 = arith.constant 0 : index
    %10 = vector.load %arg4[%c0_6, %c0_7] : memref<512x512xbf16, #tpu.memory_space<vmem>>, vector<512x512xbf16>
    %cst_8 = arith.constant dense<0.000000e+00> : vector<16x512xf32>
    %11 = tpu.matmul %9, %10, %cst_8 {dimension_numbers = #tpu.dot_dimension_numbers<[1], [0], [0], [1], [0, 0, 1, 1], [], []>} : vector<16x512xbf16>, vector<512x512xbf16>, vector<16x512xf32> -> vector<16x512xf32>
    %c0_9 = arith.constant 0 : index
    %c0_10 = arith.constant 0 : index
    %12 = vector.load %arg5[%c0_9, %c0_10] : memref<1x512xf32, #tpu.memory_space<vmem>>, vector<1x512xf32>
    %13 = vector.broadcast %12 : vector<1x512xf32> to vector<16x512xf32>
    %14 = arith.addf %11, %13 : vector<16x512xf32>
    %cst_11 = arith.constant 0.000000e+00 : f32
    %15 = vector.broadcast %cst_11 : f32 to vector<16x512xf32>
    %16 = arith.maximumf %14, %15 : vector<16x512xf32>
    %17 = arith.truncf %16 : vector<16x512xf32> to vector<16x512xbf16>
    %c0_12 = arith.constant 0 : index
    %c0_13 = arith.constant 0 : index
    %18 = vector.load %arg6[%c0_12, %c0_13] : memref<512x784xbf16, #tpu.memory_space<vmem>>, vector<512x784xbf16>
    %cst_14 = arith.constant dense<0.000000e+00> : vector<16x784xf32>
    %19 = tpu.matmul %17, %18, %cst_14 {dimension_numbers = #tpu.dot_dimension_numbers<[1], [0], [0], [1], [0, 0, 1, 1], [], []>} : vector<16x512xbf16>, vector<512x784xbf16>, vector<16x784xf32> -> vector<16x784xf32>
    %c0_15 = arith.constant 0 : index
    %c0_16 = arith.constant 0 : index
    %20 = vector.load %arg7[%c0_15, %c0_16] : memref<1x784xf32, #tpu.memory_space<vmem>>, vector<1x784xf32>
    %21 = vector.broadcast %20 : vector<1x784xf32> to vector<16x784xf32>
    %22 = arith.addf %19, %21 : vector<16x784xf32>
    %c0_17 = arith.constant 0 : index
    %c0_18 = arith.constant 0 : index
    %23 = vector.load %arg8[%c0_17, %c0_18] : memref<16x784xf32, #tpu.memory_space<vmem>>, vector<16x784xf32>
    tpu.vector_store %arg8[%c0_17, %c0_18], %22 {strides = array<i32>} : memref<16x784xf32, #tpu.memory_space<vmem>>, vector<16x784xf32>,
    return
  }
  func.func @transform_0(%arg0: i32) -> (i32, i32) {
    %c0_i32 = arith.constant 0 : i32
    %c0_i32_0 = arith.constant 0 : i32
    return %arg0, %c0_i32 : i32, i32
  }
  func.func @transform_1(%arg0: i32) -> (i32, i32) {
    %c0_i32 = arith.constant 0 : i32
    %c0_i32_0 = arith.constant 0 : i32
    %c0_i32_1 = arith.constant 0 : i32
    return %c0_i32, %c0_i32_0 : i32, i32
  }
  func.func @transform_2(%arg0: i32) -> (i32, i32) {
    %c0_i32 = arith.constant 0 : i32
    %c0_i32_0 = arith.constant 0 : i32
    %c0_i32_1 = arith.constant 0 : i32
    return %c0_i32, %c0_i32_0 : i32, i32
  }
  func.func @transform_3(%arg0: i32) -> (i32, i32) {
    %c0_i32 = arith.constant 0 : i32
    %c0_i32_0 = arith.constant 0 : i32
    %c0_i32_1 = arith.constant 0 : i32
    return %c0_i32, %c0_i32_0 : i32, i32
  }
  func.func @transform_4(%arg0: i32) -> (i32, i32) {
    %c0_i32 = arith.constant 0 : i32
    %c0_i32_0 = arith.constant 0 : i32
    %c0_i32_1 = arith.constant 0 : i32
    return %c0_i32, %c0_i32_0 : i32, i32
  }
  func.func @transform_5(%arg0: i32) -> (i32, i32) {
    %c0_i32 = arith.constant 0 : i32
    %c0_i32_0 = arith.constant 0 : i32
    %c0_i32_1 = arith.constant 0 : i32
    return %c0_i32, %c0_i32_0 : i32, i32
  }
  func.func @transform_6(%arg0: i32) -> (i32, i32) {
    %c0_i32 = arith.constant 0 : i32
    %c0_i32_0 = arith.constant 0 : i32
    %c0_i32_1 = arith.constant 0 : i32
    return %c0_i32, %c0_i32_0 : i32, i32
  }
  func.func @transform_7(%arg0: i32) -> (i32, i32) {
    %c0_i32 = arith.constant 0 : i32
    %c0_i32_0 = arith.constant 0 : i32
    return %arg0, %c0_i32 : i32, i32
  }
}

</mosaic_0001>

<llo_original>
// kernel: tpu_custom_call.1
$region0: #{tpu_custom_call.1}
  #allocation0 [shape = 'u32[]', space=smem, size = 0x4, offset = 0x4, fixed_abs, tag = 'smem constant byte address 0x4 - core index']
  #allocation1 [shape = 'u32[144,128]{1,0:T(1,128)}', space=vmem, size = 0x12000, scoped, tag = 'internal scratch']
  %s0 = inlined_call_operand.vmem [shape: f32[16,8], index: 0, kind: input, shape index: {}]
  %s1 = inlined_call_operand.vmem [shape: bf16[8,512], index: 1, kind: input, shape index: {}]
  %s2 = inlined_call_operand.vmem [shape: f32[1,512], index: 2, kind: input, shape index: {}]
  %s3 = inlined_call_operand.vmem [shape: bf16[512,512], index: 3, kind: input, shape index: {}]
  %s4 = inlined_call_operand.vmem [shape: f32[1,512], index: 4, kind: input, shape index: {}]
  %s5 = inlined_call_operand.vmem [shape: bf16[512,784], index: 5, kind: input, shape index: {}]
  %s6 = inlined_call_operand.vmem [shape: f32[1,784], index: 6, kind: input, shape index: {}]
  %s7 = inlined_call_operand.hbm [shape: f32[16,784], index: 7, kind: output, shape index: {}]
  %s8 = sld [smem:[#allocation0]]
  $region38: #{tpu_custom_call.1} parent=0
    _
  %s10 = ssub.s32 1, %s8
  %s11 = scalar_select 0, %s10, %s8
  $region1: #{tpu_custom_call.1} parent=0
    #allocation2 [shape = 'u8[57344]{0}', space=vmem, size = 0xe000, scoped, tag = 'output window, operand 0, single buffered']
    #allocation3 [shape = 's32[1]{0}', space=sflag, size = 0x4, scoped, tag = 'scoped memory for tpu_custom_call.1']
    %12 = vsyncpa [#allocation3], 0
    // Predicated region
    $region2: #{tpu_custom_call.1} parent=1 // pred_check
      _
    $region3: #{tpu_custom_call.1} parent=1 // pred_check_branch
      %14 = sbr.rel (0) target = $region5
    $region4: #{tpu_custom_call.1} parent=1 // pred_region
      _
    $region5: #{tpu_custom_call.1} parent=1 // pred_fallthru
      _
    // Predicated region
    $region6: #{tpu_custom_call.1} parent=1 // pred_check
      _
    $region7: #{tpu_custom_call.1} parent=1 // pred_check_branch
      %16 = sbr.rel (0) target = $region9
    $region8: #{tpu_custom_call.1} parent=1 // pred_region
      _
    $region9: #{tpu_custom_call.1} parent=1 // pred_fallthru
      _
    // Predicated region
    $region10: #{tpu_custom_call.1} parent=1 // pred_check
      _
    $region11: #{tpu_custom_call.1} parent=1 // pred_check_branch
      %18 = sbr.rel (0) target = $region13
    $region12: #{tpu_custom_call.1} parent=1 // pred_region
      _
    $region13: #{tpu_custom_call.1} parent=1 // pred_fallthru
      _
    // Predicated region
    $region14: #{tpu_custom_call.1} parent=1 // pred_check
      _
    $region15: #{tpu_custom_call.1} parent=1 // pred_check_branch
      %20 = sbr.rel (0) target = $region17
    $region16: #{tpu_custom_call.1} parent=1 // pred_region
      _
    $region17: #{tpu_custom_call.1} parent=1 // pred_fallthru
      _
    // Predicated region
    $region18: #{tpu_custom_call.1} parent=1 // pred_check
      _
    $region19: #{tpu_custom_call.1} parent=1 // pred_check_branch
      %22 = sbr.rel (0) target = $region21
    $region20: #{tpu_custom_call.1} parent=1 // pred_region
      _
    $region21: #{tpu_custom_call.1} parent=1 // pred_fallthru
      _
    // Predicated region
    $region22: #{tpu_custom_call.1} parent=1 // pred_check
      _
    $region23: #{tpu_custom_call.1} parent=1 // pred_check_branch
      %24 = sbr.rel (0) target = $region25
    $region24: #{tpu_custom_call.1} parent=1 // pred_region
      _
    $region25: #{tpu_custom_call.1} parent=1 // pred_fallthru
      _
    // Predicated region
    $region26: #{tpu_custom_call.1} parent=1 // pred_check
      _
    $region27: #{tpu_custom_call.1} parent=1 // pred_check_branch
      %26 = sbr.rel (0) target = $region29
    $region28: #{tpu_custom_call.1} parent=1 // pred_region
      _
    $region29: #{tpu_custom_call.1} parent=1 // pred_fallthru
      _
    %v28 = vld [vmem:[%s0] sm:$0xff]
    %v29 = vld [vmem:[%s0 + $0x8] sm:$0xff]
    %v30 = vpack.c.bf16 %v29, %v28
    %v31 = vld [vmem:[%s1] sm:$0xff]
    %v32 = vld [vmem:[%s1 + $0x8] sm:$0xff]
    %v33 = vld [vmem:[%s2] sm:$0xf]
    %v35 = vlaneseq
    %v36 = vshrl.u32 %v35, 7
    %v37 = vsub.s32 0, %v36
    %v38 = vrot.slane %v33, %v37
    %v39 = vlaneseq
    %v40 = vshrl.u32 %v39, 7
    %v41 = vsub.s32 1, %v40
    %v42 = vrot.slane %v33, %v41
    %v43 = vlaneseq
    %v44 = vshrl.u32 %v43, 7
    %v45 = vsub.s32 2, %v44
    %v46 = vrot.slane %v33, %v45
    %v47 = vlaneseq
    %v48 = vshrl.u32 %v47, 7
    %v49 = vsub.s32 3, %v48
    %v50 = vrot.slane %v33, %v49
    %v57 = vunpack.c.l.b16 %v31
    %v58 = vunpack.c.h.b16 %v31
    %v59 = vunpack.c.l.b16 %v32
    %v60 = vunpack.c.h.b16 %v32
    %v61 = vpack.c.b16 %v57, %v57
    %v62 = vpack.c.b16 %v58, %v58
    %v63 = vpack.c.b16 %v59, %v59
    %v64 = vpack.c.b16 %v60, %v60
    %vm65 = vcmask 64512
    %v67 = vsel %vm65, %v30, 0
    %vm69 = vcmask 1043456
    %v71 = vsel %vm69, %v61, 0
    %v74 = vsel %vm69, %v62, 0
    %v77 = vsel %vm69, %v63, 0
    %v80 = vsel %vm69, %v64, 0
    %82 = vmatprep.subr.bf16.mxu0 %v74
    %83 = vmatpush1.bf16.msra.mxu0 %v71
    %84 = vmatprep.subr.bf16.mxu0 0
    %85 = vmatpush1.bf16.msra.mxu0 0
    %86 = vmatprep.subr.bf16.mxu0 0
    %87 = vmatpush1.bf16.msra.mxu0 0
    %88 = vmatprep.subr.bf16.mxu0 0
    %89 = vmatpush1.bf16.msra.mxu0 0
    %90 = vmatprep.subr.bf16.mxu0 0
    %91 = vmatpush1.bf16.msra.mxu0 0
    %92 = vmatprep.subr.bf16.mxu0 0
    %93 = vmatpush1.bf16.msra.mxu0 0
    %94 = vmatprep.subr.bf16.mxu0 0
    %95 = vmatpush1.bf16.msra.mxu0 0
    %96 = vmatprep.subr.bf16.mxu0 0
    %97 = vmatpush1.bf16.msra.mxu0 0
    %98 = vmatprep.subr.bf16.mxu0 0
    %99 = vmatpush1.bf16.msra.mxu0 0
    %100 = vmatprep.subr.bf16.mxu0 0
    %101 = vmatpush1.bf16.msra.mxu0 0
    %102 = vmatprep.subr.bf16.mxu0 0
    %103 = vmatpush1.bf16.msra.mxu0 0
    %104 = vmatprep.subr.bf16.mxu0 0
    %105 = vmatpush1.bf16.msra.mxu0 0
    %106 = vmatprep.subr.bf16.mxu0 0
    %107 = vmatpush1.bf16.msra.mxu0 0
    %108 = vmatprep.subr.bf16.mxu0 0
    %109 = vmatpush1.bf16.msra.mxu0 0
    %110 = vmatprep.subr.bf16.mxu0 0
    %111 = vmatpush1.bf16.msra.mxu0 0
    %112 = vmatprep.subr.bf16.mxu0 0
    %113 = vmatpush1.bf16.msra.mxu0 0
    %114 = vmatprep.mubr.bf16.mxu0 0
    %115 = vmatmul.mubr.bf16.gmra.mrb[0].mxu0 %v67
    %v116 = vpop.f32.mrb[0].mxu0
    %v117 = vadd.f32 %v38, %v116
    %v118 = vpop.f32.mrb[0].mxu0
    %v119 = vadd.f32 %v42, %v118
    %v120 = vpop.f32.mrb[0].mxu0
    %v121 = vadd.f32 %v38, %v120
    %v122 = vpop.f32.mrb[0].mxu0
    %v123 = vadd.f32 %v42, %v122
    %124 = vdwg.mxu0
    %125 = vmatprep.subr.bf16.mxu0 %v80
    %126 = vmatpush1.bf16.msra.mxu0 %v77
    %127 = vmatprep.subr.bf16.mxu0 0
    %128 = vmatpush1.bf16.msra.mxu0 0
    %129 = vmatprep.subr.bf16.mxu0 0
    %130 = vmatpush1.bf16.msra.mxu0 0
    %131 = vmatprep.subr.bf16.mxu0 0
    %132 = vmatpush1.bf16.msra.mxu0 0
    %133 = vmatprep.subr.bf16.mxu0 0
    %134 = vmatpush1.bf16.msra.mxu0 0
    %135 = vmatprep.subr.bf16.mxu0 0
    %136 = vmatpush1.bf16.msra.mxu0 0
    %137 = vmatprep.subr.bf16.mxu0 0
    %138 = vmatpush1.bf16.msra.mxu0 0
    %139 = vmatprep.subr.bf16.mxu0 0
    %140 = vmatpush1.bf16.msra.mxu0 0
    %141 = vmatprep.subr.bf16.mxu0 0
    %142 = vmatpush1.bf16.msra.mxu0 0
    %143 = vmatprep.subr.bf16.mxu0 0
    %144 = vmatpush1.bf16.msra.mxu0 0
    %145 = vmatprep.subr.bf16.mxu0 0
    %146 = vmatpush1.bf16.msra.mxu0 0
    %147 = vmatprep.subr.bf16.mxu0 0
    %148 = vmatpush1.bf16.msra.mxu0 0
    %149 = vmatprep.subr.bf16.mxu0 0
    %150 = vmatpush1.bf16.msra.mxu0 0
    %151 = vmatprep.subr.bf16.mxu0 0
    %152 = vmatpush1.bf16.msra.mxu0 0
    %153 = vmatprep.subr.bf16.mxu0 0
    %154 = vmatpush1.bf16.msra.mxu0 0
    %155 = vmatprep.subr.bf16.mxu0 0
    %156 = vmatpush1.bf16.msra.mxu0 0
    %157 = vmatprep.mubr.bf16.mxu0 0
    %158 = vmatmul.mubr.bf16.gmra.mrb[0].mxu0 %v67
    %v159 = vpop.f32.mrb[0].mxu0
    %v160 = vadd.f32 %v46, %v159
    %v161 = vpop.f32.mrb[0].mxu0
    %v162 = vadd.f32 %v50, %v161
    %v163 = vpop.f32.mrb[0].mxu0
    %v164 = vadd.f32 %v46, %v163
    %v165 = vpop.f32.mrb[0].mxu0
    %v166 = vadd.f32 %v50, %v165
    %167 = vdwg.mxu0
    %v168 = vmax.f32 %v117, 0.0
    %v169 = vmax.f32 %v119, 0.0
    %v170 = vmax.f32 %v160, 0.0
    %v171 = vmax.f32 %v162, 0.0
    %v172 = vmax.f32 %v121, 0.0
    %v173 = vmax.f32 %v123, 0.0
    %v174 = vmax.f32 %v164, 0.0
    %v175 = vmax.f32 %v166, 0.0
    %v176 = vpack.c.bf16 %v172, %v168
    %v177 = vpack.c.bf16 %v173, %v169
    %v178 = vpack.c.bf16 %v174, %v170
    %v179 = vpack.c.bf16 %v175, %v171
    %v180 = vld [vmem:[%s3] sm:$0xff]
    %v181 = vld [vmem:[%s3 + $0x8] sm:$0xff]
    %v182 = vld [vmem:[%s3 + $0x10] sm:$0xff]
    %v183 = vld [vmem:[%s3 + $0x18] sm:$0xff]
    %v184 = vld [vmem:[%s3 + $0x20] sm:$0xff]
    %v185 = vld [vmem:[%s3 + $0x28] sm:$0xff]
    %v186 = vld [vmem:[%s3 + $0x30] sm:$0xff]
    %v187 = vld [vmem:[%s3 + $0x38] sm:$0xff]
    %v188 = vld [vmem:[%s3 + $0x40] sm:$0xff]
    %v189 = vld [vmem:[%s3 + $0x48] sm:$0xff]
    %v190 = vld [vmem:[%s3 + $0x50] sm:$0xff]
    %v191 = vld [vmem:[%s3 + $0x58] sm:$0xff]
    %v192 = vld [vmem:[%s3 + $0x60] sm:$0xff]
    %v193 = vld [vmem:[%s3 + $0x68] sm:$0xff]
    %v194 = vld [vmem:[%s3 + $0x70] sm:$0xff]
    %v195 = vld [vmem:[%s3 + $0x78] sm:$0xff]
    %v196 = vld [vmem:[%s3 + $0x80] sm:$0xff]
    %v197 = vld [vmem:[%s3 + $0x88] sm:$0xff]
    %v198 = vld [vmem:[%s3 + $0x90] sm:$0xff]
    %v199 = vld [vmem:[%s3 + $0x98] sm:$0xff]
    %v200 = vld [vmem:[%s3 + $0xa0] sm:$0xff]
    %v201 = vld [vmem:[%s3 + $0xa8] sm:$0xff]
    %v202 = vld [vmem:[%s3 + $0xb0] sm:$0xff]
    %v203 = vld [vmem:[%s3 + $0xb8] sm:$0xff]
    %v204 = vld [vmem:[%s3 + $0xc0] sm:$0xff]
    %v205 = vld [vmem:[%s3 + $0xc8] sm:$0xff]
    %v206 = vld [vmem:[%s3 + $0xd0] sm:$0xff]
    %v207 = vld [vmem:[%s3 + $0xd8] sm:$0xff]
    %v208 = vld [vmem:[%s3 + $0xe0] sm:$0xff]
    %v209 = vld [vmem:[%s3 + $0xe8] sm:$0xff]
    %v210 = vld [vmem:[%s3 + $0xf0] sm:$0xff]
    %v211 = vld [vmem:[%s3 + $0xf8] sm:$0xff]
    %v212 = vld [vmem:[%s3 + $0x100] sm:$0xff]
    %v213 = vld [vmem:[%s3 + $0x108] sm:$0xff]
    %v214 = vld [vmem:[%s3 + $0x110] sm:$0xff]
    %v215 = vld [vmem:[%s3 + $0x118] sm:$0xff]
    %v216 = vld [vmem:[%s3 + $0x120] sm:$0xff]
    %v217 = vld [vmem:[%s3 + $0x128] sm:$0xff]
    %v218 = vld [vmem:[%s3 + $0x130] sm:$0xff]
    %v219 = vld [vmem:[%s3 + $0x138] sm:$0xff]
    %v220 = vld [vmem:[%s3 + $0x140] sm:$0xff]
    %v221 = vld [vmem:[%s3 + $0x148] sm:$0xff]
    %v222 = vld [vmem:[%s3 + $0x150] sm:$0xff]
    %v223 = vld [vmem:[%s3 + $0x158] sm:$0xff]
    %v224 = vld [vmem:[%s3 + $0x160] sm:$0xff]
    %v225 = vld [vmem:[%s3 + $0x168] sm:$0xff]
    %v226 = vld [vmem:[%s3 + $0x170] sm:$0xff]
    %v227 = vld [vmem:[%s3 + $0x178] sm:$0xff]
    %v228 = vld [vmem:[%s3 + $0x180] sm:$0xff]
    %v229 = vld [vmem:[%s3 + $0x188] sm:$0xff]
    %v230 = vld [vmem:[%s3 + $0x190] sm:$0xff]
    %v231 = vld [vmem:[%s3 + $0x198] sm:$0xff]
    %v232 = vld [vmem:[%s3 + $0x1a0] sm:$0xff]
    %v233 = vld [vmem:[%s3 + $0x1a8] sm:$0xff]
    %v234 = vld [vmem:[%s3 + $0x1b0] sm:$0xff]
    %v235 = vld [vmem:[%s3 + $0x1b8] sm:$0xff]
    %v236 = vld [vmem:[%s3 + $0x1c0] sm:$0xff]
    %v237 = vld [vmem:[%s3 + $0x1c8] sm:$0xff]
    %v238 = vld [vmem:[%s3 + $0x1d0] sm:$0xff]
    %v239 = vld [vmem:[%s3 + $0x1d8] sm:$0xff]
    %v240 = vld [vmem:[%s3 + $0x1e0] sm:$0xff]
    %v241 = vld [vmem:[%s3 + $0x1e8] sm:$0xff]
    %v242 = vld [vmem:[%s3 + $0x1f0] sm:$0xff]
    %v243 = vld [vmem:[%s3 + $0x1f8] sm:$0xff]
    %v244 = vld [vmem:[%s3 + $0x200] sm:$0xff]
    %v245 = vld [vmem:[%s3 + $0x208] sm:$0xff]
    %v246 = vld [vmem:[%s3 + $0x210] sm:$0xff]
    %v247 = vld [vmem:[%s3 + $0x218] sm:$0xff]
    %v248 = vld [vmem:[%s3 + $0x220] sm:$0xff]
    %v249 = vld [vmem:[%s3 + $0x228] sm:$0xff]
    %v250 = vld [vmem:[%s3 + $0x230] sm:$0xff]
    %v251 = vld [vmem:[%s3 + $0x238] sm:$0xff]
    %v252 = vld [vmem:[%s3 + $0x240] sm:$0xff]
    %v253 = vld [vmem:[%s3 + $0x248] sm:$0xff]
    %v254 = vld [vmem:[%s3 + $0x250] sm:$0xff]
    %v255 = vld [vmem:[%s3 + $0x258] sm:$0xff]
    %v256 = vld [vmem:[%s3 + $0x260] sm:$0xff]
    %v257 = vld [vmem:[%s3 + $0x268] sm:$0xff]
    %v258 = vld [vmem:[%s3 + $0x270] sm:$0xff]
    %v259 = vld [vmem:[%s3 + $0x278] sm:$0xff]
    %v260 = vld [vmem:[%s3 + $0x280] sm:$0xff]
    %v261 = vld [vmem:[%s3 + $0x288] sm:$0xff]
    %v262 = vld [vmem:[%s3 + $0x290] sm:$0xff]
    %v263 = vld [vmem:[%s3 + $0x298] sm:$0xff]
    %v264 = vld [vmem:[%s3 + $0x2a0] sm:$0xff]
    %v265 = vld [vmem:[%s3 + $0x2a8] sm:$0xff]
    %v266 = vld [vmem:[%s3 + $0x2b0] sm:$0xff]
    %v267 = vld [vmem:[%s3 + $0x2b8] sm:$0xff]
    %v268 = vld [vmem:[%s3 + $0x2c0] sm:$0xff]
    %v269 = vld [vmem:[%s3 + $0x2c8] sm:$0xff]
    %v270 = vld [vmem:[%s3 + $0x2d0] sm:$0xff]
    %v271 = vld [vmem:[%s3 + $0x2d8] sm:$0xff]
    %v272 = vld [vmem:[%s3 + $0x2e0] sm:$0xff]
    %v273 = vld [vmem:[%s3 + $0x2e8] sm:$0xff]
    %v274 = vld [vmem:[%s3 + $0x2f0] sm:$0xff]
    %v275 = vld [vmem:[%s3 + $0x2f8] sm:$0xff]
    %v276 = vld [vmem:[%s3 + $0x300] sm:$0xff]
    %v277 = vld [vmem:[%s3 + $0x308] sm:$0xff]
    %v278 = vld [vmem:[%s3 + $0x310] sm:$0xff]
    %v279 = vld [vmem:[%s3 + $0x318] sm:$0xff]
    %v280 = vld [vmem:[%s3 + $0x320] sm:$0xff]
    %v281 = vld [vmem:[%s3 + $0x328] sm:$0xff]
    %v282 = vld [vmem:[%s3 + $0x330] sm:$0xff]
    %v283 = vld [vmem:[%s3 + $0x338] sm:$0xff]
    %v284 = vld [vmem:[%s3 + $0x340] sm:$0xff]
    %v285 = vld [vmem:[%s3 + $0x348] sm:$0xff]
    %v286 = vld [vmem:[%s3 + $0x350] sm:$0xff]
    %v287 = vld [vmem:[%s3 + $0x358] sm:$0xff]
    %v288 = vld [vmem:[%s3 + $0x360] sm:$0xff]
    %v289 = vld [vmem:[%s3 + $0x368] sm:$0xff]
    %v290 = vld [vmem:[%s3 + $0x370] sm:$0xff]
    %v291 = vld [vmem:[%s3 + $0x378] sm:$0xff]
    %v292 = vld [vmem:[%s3 + $0x380] sm:$0xff]
    %v293 = vld [vmem:[%s3 + $0x388] sm:$0xff]
    %v294 = vld [vmem:[%s3 + $0x390] sm:$0xff]
    %v295 = vld [vmem:[%s3 + $0x398] sm:$0xff]
    %v296 = vld [vmem:[%s3 + $0x3a0] sm:$0xff]
    %v297 = vld [vmem:[%s3 + $0x3a8] sm:$0xff]
    %v298 = vld [vmem:[%s3 + $0x3b0] sm:$0xff]
    %v299 = vld [vmem:[%s3 + $0x3b8] sm:$0xff]
    %v300 = vld [vmem:[%s3 + $0x3c0] sm:$0xff]
    %v301 = vld [vmem:[%s3 + $0x3c8] sm:$0xff]
    %v302 = vld [vmem:[%s3 + $0x3d0] sm:$0xff]
    %v303 = vld [vmem:[%s3 + $0x3d8] sm:$0xff]
    %v304 = vld [vmem:[%s3 + $0x3e0] sm:$0xff]
    %v305 = vld [vmem:[%s3 + $0x3e8] sm:$0xff]
    %v306 = vld [vmem:[%s3 + $0x3f0] sm:$0xff]
    %v307 = vld [vmem:[%s3 + $0x3f8] sm:$0xff]
    %v308 = vld [vmem:[%s4] sm:$0xf]
    %v310 = vlaneseq
    %v311 = vshrl.u32 %v310, 7
    %v312 = vsub.s32 0, %v311
    %v313 = vrot.slane %v308, %v312
    %v314 = vlaneseq
    %v315 = vshrl.u32 %v314, 7
    %v316 = vsub.s32 1, %v315
    %v317 = vrot.slane %v308, %v316
    %v318 = vlaneseq
    %v319 = vshrl.u32 %v318, 7
    %v320 = vsub.s32 2, %v319
    %v321 = vrot.slane %v308, %v320
    %v322 = vlaneseq
    %v323 = vshrl.u32 %v322, 7
    %v324 = vsub.s32 3, %v323
    %v325 = vrot.slane %v308, %v324
    %v458 = vunpack.c.l.b16 %v180
    %v459 = vunpack.c.h.b16 %v180
    %v460 = vunpack.c.l.b16 %v181
    %v461 = vunpack.c.h.b16 %v181
    %v462 = vunpack.c.l.b16 %v182
    %v463 = vunpack.c.h.b16 %v182
    %v464 = vunpack.c.l.b16 %v183
    %v465 = vunpack.c.h.b16 %v183
    %v466 = vunpack.c.l.b16 %v184
    %v467 = vunpack.c.h.b16 %v184
    %v468 = vunpack.c.l.b16 %v185
    %v469 = vunpack.c.h.b16 %v185
    %v470 = vunpack.c.l.b16 %v186
    %v471 = vunpack.c.h.b16 %v186
    %v472 = vunpack.c.l.b16 %v187
    %v473 = vunpack.c.h.b16 %v187
    %v474 = vunpack.c.l.b16 %v188
    %v475 = vunpack.c.h.b16 %v188
    %v476 = vunpack.c.l.b16 %v189
    %v477 = vunpack.c.h.b16 %v189
    %v478 = vunpack.c.l.b16 %v190
    %v479 = vunpack.c.h.b16 %v190
    %v480 = vunpack.c.l.b16 %v191
    %v481 = vunpack.c.h.b16 %v191
    %v482 = vunpack.c.l.b16 %v192
    %v483 = vunpack.c.h.b16 %v192
    %v484 = vunpack.c.l.b16 %v193
    %v485 = vunpack.c.h.b16 %v193
    %v486 = vunpack.c.l.b16 %v194
    %v487 = vunpack.c.h.b16 %v194
    %v488 = vunpack.c.l.b16 %v195
    %v489 = vunpack.c.h.b16 %v195
    %v490 = vunpack.c.l.b16 %v196
    %v491 = vunpack.c.h.b16 %v196
    %v492 = vunpack.c.l.b16 %v197
    %v493 = vunpack.c.h.b16 %v197
    %v494 = vunpack.c.l.b16 %v198
    %v495 = vunpack.c.h.b16 %v198
    %v496 = vunpack.c.l.b16 %v199
    %v497 = vunpack.c.h.b16 %v199
    %v498 = vunpack.c.l.b16 %v200
    %v499 = vunpack.c.h.b16 %v200
    %v500 = vunpack.c.l.b16 %v201
    %v501 = vunpack.c.h.b16 %v201
    %v502 = vunpack.c.l.b16 %v202
    %v503 = vunpack.c.h.b16 %v202
    %v504 = vunpack.c.l.b16 %v203
    %v505 = vunpack.c.h.b16 %v203
    %v506 = vunpack.c.l.b16 %v204
    %v507 = vunpack.c.h.b16 %v204
    %v508 = vunpack.c.l.b16 %v205
    %v509 = vunpack.c.h.b16 %v205
    %v510 = vunpack.c.l.b16 %v206
    %v511 = vunpack.c.h.b16 %v206
    %v512 = vunpack.c.l.b16 %v207
    %v513 = vunpack.c.h.b16 %v207
    %v514 = vunpack.c.l.b16 %v208
    %v515 = vunpack.c.h.b16 %v208
    %v516 = vunpack.c.l.b16 %v209
    %v517 = vunpack.c.h.b16 %v209
    %v518 = vunpack.c.l.b16 %v210
    %v519 = vunpack.c.h.b16 %v210
    %v520 = vunpack.c.l.b16 %v211
    %v521 = vunpack.c.h.b16 %v211
    %v522 = vunpack.c.l.b16 %v212
    %v523 = vunpack.c.h.b16 %v212
    %v524 = vunpack.c.l.b16 %v213
    %v525 = vunpack.c.h.b16 %v213
    %v526 = vunpack.c.l.b16 %v214
    %v527 = vunpack.c.h.b16 %v214
    %v528 = vunpack.c.l.b16 %v215
    %v529 = vunpack.c.h.b16 %v215
    %v530 = vunpack.c.l.b16 %v216
    %v531 = vunpack.c.h.b16 %v216
    %v532 = vunpack.c.l.b16 %v217
    %v533 = vunpack.c.h.b16 %v217
    %v534 = vunpack.c.l.b16 %v218
    %v535 = vunpack.c.h.b16 %v218
    %v536 = vunpack.c.l.b16 %v219
    %v537 = vunpack.c.h.b16 %v219
    %v538 = vunpack.c.l.b16 %v220
    %v539 = vunpack.c.h.b16 %v220
    %v540 = vunpack.c.l.b16 %v221
    %v541 = vunpack.c.h.b16 %v221
    %v542 = vunpack.c.l.b16 %v222
    %v543 = vunpack.c.h.b16 %v222
    %v544 = vunpack.c.l.b16 %v223
    %v545 = vunpack.c.h.b16 %v223
    %v546 = vunpack.c.l.b16 %v224
    %v547 = vunpack.c.h.b16 %v224
    %v548 = vunpack.c.l.b16 %v225
    %v549 = vunpack.c.h.b16 %v225
    %v550 = vunpack.c.l.b16 %v226
    %v551 = vunpack.c.h.b16 %v226
    %v552 = vunpack.c.l.b16 %v227
    %v553 = vunpack.c.h.b16 %v227
    %v554 = vunpack.c.l.b16 %v228
    %v555 = vunpack.c.h.b16 %v228
    %v556 = vunpack.c.l.b16 %v229
    %v557 = vunpack.c.h.b16 %v229
    %v558 = vunpack.c.l.b16 %v230
    %v559 = vunpack.c.h.b16 %v230
    %v560 = vunpack.c.l.b16 %v231
    %v561 = vunpack.c.h.b16 %v231
    %v562 = vunpack.c.l.b16 %v232
    %v563 = vunpack.c.h.b16 %v232
    %v564 = vunpack.c.l.b16 %v233
    %v565 = vunpack.c.h.b16 %v233
    %v566 = vunpack.c.l.b16 %v234
    %v567 = vunpack.c.h.b16 %v234
    %v568 = vunpack.c.l.b16 %v235
    %v569 = vunpack.c.h.b16 %v235
    %v570 = vunpack.c.l.b16 %v236
    %v571 = vunpack.c.h.b16 %v236
    %v572 = vunpack.c.l.b16 %v237
    %v573 = vunpack.c.h.b16 %v237
    %v574 = vunpack.c.l.b16 %v238
    %v575 = vunpack.c.h.b16 %v238
    %v576 = vunpack.c.l.b16 %v239
    %v577 = vunpack.c.h.b16 %v239
    %v578 = vunpack.c.l.b16 %v240
    %v579 = vunpack.c.h.b16 %v240
    %v580 = vunpack.c.l.b16 %v241
    %v581 = vunpack.c.h.b16 %v241
    %v582 = vunpack.c.l.b16 %v242
    %v583 = vunpack.c.h.b16 %v242
    %v584 = vunpack.c.l.b16 %v243
    %v585 = vunpack.c.h.b16 %v243
    %v586 = vunpack.c.l.b16 %v244
    %v587 = vunpack.c.h.b16 %v244
    %v588 = vunpack.c.l.b16 %v245
    %v589 = vunpack.c.h.b16 %v245
    %v590 = vunpack.c.l.b16 %v246
    %v591 = vunpack.c.h.b16 %v246
    %v592 = vunpack.c.l.b16 %v247
    %v593 = vunpack.c.h.b16 %v247
    %v594 = vunpack.c.l.b16 %v248
    %v595 = vunpack.c.h.b16 %v248
    %v596 = vunpack.c.l.b16 %v249
    %v597 = vunpack.c.h.b16 %v249
    %v598 = vunpack.c.l.b16 %v250
    %v599 = vunpack.c.h.b16 %v250
    %v600 = vunpack.c.l.b16 %v251
    %v601 = vunpack.c.h.b16 %v251
    %v602 = vunpack.c.l.b16 %v252
    %v603 = vunpack.c.h.b16 %v252
    %v604 = vunpack.c.l.b16 %v253
    %v605 = vunpack.c.h.b16 %v253
    %v606 = vunpack.c.l.b16 %v254
    %v607 = vunpack.c.h.b16 %v254
    %v608 = vunpack.c.l.b16 %v255
    %v609 = vunpack.c.h.b16 %v255
    %v610 = vunpack.c.l.b16 %v256
    %v611 = vunpack.c.h.b16 %v256
    %v612 = vunpack.c.l.b16 %v257
    %v613 = vunpack.c.h.b16 %v257
    %v614 = vunpack.c.l.b16 %v258
    %v615 = vunpack.c.h.b16 %v258
    %v616 = vunpack.c.l.b16 %v259
    %v617 = vunpack.c.h.b16 %v259
    %v618 = vunpack.c.l.b16 %v260
    %v619 = vunpack.c.h.b16 %v260
    %v620 = vunpack.c.l.b16 %v261
    %v621 = vunpack.c.h.b16 %v261
    %v622 = vunpack.c.l.b16 %v262
    %v623 = vunpack.c.h.b16 %v262
    %v624 = vunpack.c.l.b16 %v263
    %v625 = vunpack.c.h.b16 %v263
    %v626 = vunpack.c.l.b16 %v264
    %v627 = vunpack.c.h.b16 %v264
    %v628 = vunpack.c.l.b16 %v265
    %v629 = vunpack.c.h.b16 %v265
    %v630 = vunpack.c.l.b16 %v266
    %v631 = vunpack.c.h.b16 %v266
    %v632 = vunpack.c.l.b16 %v267
    %v633 = vunpack.c.h.b16 %v267
    %v634 = vunpack.c.l.b16 %v268
    %v635 = vunpack.c.h.b16 %v268
    %v636 = vunpack.c.l.b16 %v269
    %v637 = vunpack.c.h.b16 %v269
    %v638 = vunpack.c.l.b16 %v270
    %v639 = vunpack.c.h.b16 %v270
    %v640 = vunpack.c.l.b16 %v271
    %v641 = vunpack.c.h.b16 %v271
    %v642 = vunpack.c.l.b16 %v272
    %v643 = vunpack.c.h.b16 %v272
    %v644 = vunpack.c.l.b16 %v273
    %v645 = vunpack.c.h.b16 %v273
    %v646 = vunpack.c.l.b16 %v274
    %v647 = vunpack.c.h.b16 %v274
    %v648 = vunpack.c.l.b16 %v275
    %v649 = vunpack.c.h.b16 %v275
    %v650 = vunpack.c.l.b16 %v276
    %v651 = vunpack.c.h.b16 %v276
    %v652 = vunpack.c.l.b16 %v277
    %v653 = vunpack.c.h.b16 %v277
    %v654 = vunpack.c.l.b16 %v278
    %v655 = vunpack.c.h.b16 %v278
    %v656 = vunpack.c.l.b16 %v279
    %v657 = vunpack.c.h.b16 %v279
    %v658 = vunpack.c.l.b16 %v280
    %v659 = vunpack.c.h.b16 %v280
    %v660 = vunpack.c.l.b16 %v281
    %v661 = vunpack.c.h.b16 %v281
    %v662 = vunpack.c.l.b16 %v282
    %v663 = vunpack.c.h.b16 %v282
    %v664 = vunpack.c.l.b16 %v283
    %v665 = vunpack.c.h.b16 %v283
    %v666 = vunpack.c.l.b16 %v284
    %v667 = vunpack.c.h.b16 %v284
    %v668 = vunpack.c.l.b16 %v285
    %v669 = vunpack.c.h.b16 %v285
    %v670 = vunpack.c.l.b16 %v286
    %v671 = vunpack.c.h.b16 %v286
    %v672 = vunpack.c.l.b16 %v287
    %v673 = vunpack.c.h.b16 %v287
    %v674 = vunpack.c.l.b16 %v288
    %v675 = vunpack.c.h.b16 %v288
    %v676 = vunpack.c.l.b16 %v289
    %v677 = vunpack.c.h.b16 %v289
    %v678 = vunpack.c.l.b16 %v290
    %v679 = vunpack.c.h.b16 %v290
    %v680 = vunpack.c.l.b16 %v291
    %v681 = vunpack.c.h.b16 %v291
    %v682 = vunpack.c.l.b16 %v292
    %v683 = vunpack.c.h.b16 %v292
    %v684 = vunpack.c.l.b16 %v293
    %v685 = vunpack.c.h.b16 %v293
    %v686 = vunpack.c.l.b16 %v294
    %v687 = vunpack.c.h.b16 %v294
    %v688 = vunpack.c.l.b16 %v295
    %v689 = vunpack.c.h.b16 %v295
    %v690 = vunpack.c.l.b16 %v296
    %v691 = vunpack.c.h.b16 %v296
    %v692 = vunpack.c.l.b16 %v297
    %v693 = vunpack.c.h.b16 %v297
    %v694 = vunpack.c.l.b16 %v298
    %v695 = vunpack.c.h.b16 %v298
    %v696 = vunpack.c.l.b16 %v299
    %v697 = vunpack.c.h.b16 %v299
    %v698 = vunpack.c.l.b16 %v300
    %v699 = vunpack.c.h.b16 %v300
    %v700 = vunpack.c.l.b16 %v301
    %v701 = vunpack.c.h.b16 %v301
    %v702 = vunpack.c.l.b16 %v302
    %v703 = vunpack.c.h.b16 %v302
    %v704 = vunpack.c.l.b16 %v303
    %v705 = vunpack.c.h.b16 %v303
    %v706 = vunpack.c.l.b16 %v304
    %v707 = vunpack.c.h.b16 %v304
    %v708 = vunpack.c.l.b16 %v305
    %v709 = vunpack.c.h.b16 %v305
    %v710 = vunpack.c.l.b16 %v306
    %v711 = vunpack.c.h.b16 %v306
    %v712 = vunpack.c.l.b16 %v307
    %v713 = vunpack.c.h.b16 %v307
    %v714 = vpack.c.b16 %v462, %v458
    %v715 = vpack.c.b16 %v463, %v459
    %v716 = vpack.c.b16 %v464, %v460
    %v717 = vpack.c.b16 %v465, %v461
    %v718 = vpack.c.b16 %v470, %v466
    %v719 = vpack.c.b16 %v471, %v467
    %v720 = vpack.c.b16 %v472, %v468
    %v721 = vpack.c.b16 %v473, %v469
    %v722 = vpack.c.b16 %v478, %v474
    %v723 = vpack.c.b16 %v479, %v475
    %v724 = vpack.c.b16 %v480, %v476
    %v725 = vpack.c.b16 %v481, %v477
    %v726 = vpack.c.b16 %v486, %v482
    %v727 = vpack.c.b16 %v487, %v483
    %v728 = vpack.c.b16 %v488, %v484
    %v729 = vpack.c.b16 %v489, %v485
    %v730 = vpack.c.b16 %v494, %v490
    %v731 = vpack.c.b16 %v495, %v491
    %v732 = vpack.c.b16 %v496, %v492
    %v733 = vpack.c.b16 %v497, %v493
    %v734 = vpack.c.b16 %v502, %v498
    %v735 = vpack.c.b16 %v503, %v499
    %v736 = vpack.c.b16 %v504, %v500
    %v737 = vpack.c.b16 %v505, %v501
    %v738 = vpack.c.b16 %v510, %v506
    %v739 = vpack.c.b16 %v511, %v507
    %v740 = vpack.c.b16 %v512, %v508
    %v741 = vpack.c.b16 %v513, %v509
    %v742 = vpack.c.b16 %v518, %v514
    %v743 = vpack.c.b16 %v519, %v515
    %v744 = vpack.c.b16 %v520, %v516
    %v745 = vpack.c.b16 %v521, %v517
    %v746 = vpack.c.b16 %v526, %v522
    %v747 = vpack.c.b16 %v527, %v523
    %v748 = vpack.c.b16 %v528, %v524
    %v749 = vpack.c.b16 %v529, %v525
    %v750 = vpack.c.b16 %v534, %v530
    %v751 = vpack.c.b16 %v535, %v531
    %v752 = vpack.c.b16 %v536, %v532
    %v753 = vpack.c.b16 %v537, %v533
    %v754 = vpack.c.b16 %v542, %v538
    %v755 = vpack.c.b16 %v543, %v539
    %v756 = vpack.c.b16 %v544, %v540
    %v757 = vpack.c.b16 %v545, %v541
    %v758 = vpack.c.b16 %v550, %v546
    %v759 = vpack.c.b16 %v551, %v547
    %v760 = vpack.c.b16 %v552, %v548
    %v761 = vpack.c.b16 %v553, %v549
    %v762 = vpack.c.b16 %v558, %v554
    %v763 = vpack.c.b16 %v559, %v555
    %v764 = vpack.c.b16 %v560, %v556
    %v765 = vpack.c.b16 %v561, %v557
    %v766 = vpack.c.b16 %v566, %v562
    %v767 = vpack.c.b16 %v567, %v563
    %v768 = vpack.c.b16 %v568, %v564
    %v769 = vpack.c.b16 %v569, %v565
    %v770 = vpack.c.b16 %v574, %v570
    %v771 = vpack.c.b16 %v575, %v571
    %v772 = vpack.c.b16 %v576, %v572
    %v773 = vpack.c.b16 %v577, %v573
    %v774 = vpack.c.b16 %v582, %v578
    %v775 = vpack.c.b16 %v583, %v579
    %v776 = vpack.c.b16 %v584, %v580
    %v777 = vpack.c.b16 %v585, %v581
    %v778 = vpack.c.b16 %v590, %v586
    %v779 = vpack.c.b16 %v591, %v587
    %v780 = vpack.c.b16 %v592, %v588
    %v781 = vpack.c.b16 %v593, %v589
    %v782 = vpack.c.b16 %v598, %v594
    %v783 = vpack.c.b16 %v599, %v595
    %v784 = vpack.c.b16 %v600, %v596
    %v785 = vpack.c.b16 %v601, %v597
    %v786 = vpack.c.b16 %v606, %v602
    %v787 = vpack.c.b16 %v607, %v603
    %v788 = vpack.c.b16 %v608, %v604
    %v789 = vpack.c.b16 %v609, %v605
    %v790 = vpack.c.b16 %v614, %v610
    %v791 = vpack.c.b16 %v615, %v611
    %v792 = vpack.c.b16 %v616, %v612
    %v793 = vpack.c.b16 %v617, %v613
    %v794 = vpack.c.b16 %v622, %v618
    %v795 = vpack.c.b16 %v623, %v619
    %v796 = vpack.c.b16 %v624, %v620
    %v797 = vpack.c.b16 %v625, %v621
    %v798 = vpack.c.b16 %v630, %v626
    %v799 = vpack.c.b16 %v631, %v627
    %v800 = vpack.c.b16 %v632, %v628
    %v801 = vpack.c.b16 %v633, %v629
    %v802 = vpack.c.b16 %v638, %v634
    %v803 = vpack.c.b16 %v639, %v635
    %v804 = vpack.c.b16 %v640, %v636
    %v805 = vpack.c.b16 %v641, %v637
    %v806 = vpack.c.b16 %v646, %v642
    %v807 = vpack.c.b16 %v647, %v643
    %v808 = vpack.c.b16 %v648, %v644
    %v809 = vpack.c.b16 %v649, %v645
    %v810 = vpack.c.b16 %v654, %v650
    %v811 = vpack.c.b16 %v655, %v651
    %v812 = vpack.c.b16 %v656, %v652
    %v813 = vpack.c.b16 %v657, %v653
    %v814 = vpack.c.b16 %v662, %v658
    %v815 = vpack.c.b16 %v663, %v659
    %v816 = vpack.c.b16 %v664, %v660
    %v817 = vpack.c.b16 %v665, %v661
    %v818 = vpack.c.b16 %v670, %v666
    %v819 = vpack.c.b16 %v671, %v667
    %v820 = vpack.c.b16 %v672, %v668
    %v821 = vpack.c.b16 %v673, %v669
    %v822 = vpack.c.b16 %v678, %v674
    %v823 = vpack.c.b16 %v679, %v675
    %v824 = vpack.c.b16 %v680, %v676
    %v825 = vpack.c.b16 %v681, %v677
    %v826 = vpack.c.b16 %v686, %v682
    %v827 = vpack.c.b16 %v687, %v683
    %v828 = vpack.c.b16 %v688, %v684
    %v829 = vpack.c.b16 %v689, %v685
    %v830 = vpack.c.b16 %v694, %v690
    %v831 = vpack.c.b16 %v695, %v691
    %v832 = vpack.c.b16 %v696, %v692
    %v833 = vpack.c.b16 %v697, %v693
    %v834 = vpack.c.b16 %v702, %v698
    %v835 = vpack.c.b16 %v703, %v699
    %v836 = vpack.c.b16 %v704, %v700
    %v837 = vpack.c.b16 %v705, %v701
    %v838 = vpack.c.b16 %v710, %v706
    %v839 = vpack.c.b16 %v711, %v707
    %v840 = vpack.c.b16 %v712, %v708
    %v841 = vpack.c.b16 %v713, %v709
    %970 = vmatprep.subr.bf16.mxu0 %v715
    %971 = vmatpush1.bf16.msra.mxu0 %v714
    %972 = vmatprep.subr.bf16.mxu0 %v719
    %973 = vmatpush1.bf16.msra.mxu0 %v718
    %974 = vmatprep.subr.bf16.mxu0 %v723
    %975 = vmatpush1.bf16.msra.mxu0 %v722
    %976 = vmatprep.subr.bf16.mxu0 %v727
    %977 = vmatpush1.bf16.msra.mxu0 %v726
    %978 = vmatprep.subr.bf16.mxu0 %v731
    %979 = vmatpush1.bf16.msra.mxu0 %v730
    %980 = vmatprep.subr.bf16.mxu0 %v735
    %981 = vmatpush1.bf16.msra.mxu0 %v734
    %982 = vmatprep.subr.bf16.mxu0 %v739
    %983 = vmatpush1.bf16.msra.mxu0 %v738
    %984 = vmatprep.subr.bf16.mxu0 %v743
    %985 = vmatpush1.bf16.msra.mxu0 %v742
    %986 = vmatprep.subr.bf16.mxu0 %v747
    %987 = vmatpush1.bf16.msra.mxu0 %v746
    %988 = vmatprep.subr.bf16.mxu0 %v751
    %989 = vmatpush1.bf16.msra.mxu0 %v750
    %990 = vmatprep.subr.bf16.mxu0 %v755
    %991 = vmatpush1.bf16.msra.mxu0 %v754
    %992 = vmatprep.subr.bf16.mxu0 %v759
    %993 = vmatpush1.bf16.msra.mxu0 %v758
    %994 = vmatprep.subr.bf16.mxu0 %v763
    %995 = vmatpush1.bf16.msra.mxu0 %v762
    %996 = vmatprep.subr.bf16.mxu0 %v767
    %997 = vmatpush1.bf16.msra.mxu0 %v766
    %998 = vmatprep.subr.bf16.mxu0 %v771
    %999 = vmatpush1.bf16.msra.mxu0 %v770
    %1000 = vmatprep.subr.bf16.mxu0 %v775
    %1001 = vmatpush1.bf16.msra.mxu0 %v774
    %1002 = vmatprep.mubr.bf16.mxu0 %v177
    %1003 = vmatmul.mubr.bf16.gmra.mrb[0].mxu0 %v176
    %v1004 = vpop.f32.mrb[0].mxu0
    %v1005 = vadd.f32 %v313, %v1004
    %v1006 = vpop.f32.mrb[0].mxu0
    %v1007 = vadd.f32 %v317, %v1006
    %v1008 = vpop.f32.mrb[0].mxu0
    %v1009 = vadd.f32 %v313, %v1008
    %v1010 = vpop.f32.mrb[0].mxu0
    %v1011 = vadd.f32 %v317, %v1010
    %1012 = vdwg.mxu0
    %1013 = vmatprep.subr.bf16.mxu0 %v779
    %1014 = vmatpush1.bf16.msra.mxu0 %v778
    %1015 = vmatprep.subr.bf16.mxu0 %v783
    %1016 = vmatpush1.bf16.msra.mxu0 %v782
    %1017 = vmatprep.subr.bf16.mxu0 %v787
    %1018 = vmatpush1.bf16.msra.mxu0 %v786
    %1019 = vmatprep.subr.bf16.mxu0 %v791
    %1020 = vmatpush1.bf16.msra.mxu0 %v790
    %1021 = vmatprep.subr.bf16.mxu0 %v795
    %1022 = vmatpush1.bf16.msra.mxu0 %v794
    %1023 = vmatprep.subr.bf16.mxu0 %v799
    %1024 = vmatpush1.bf16.msra.mxu0 %v798
    %1025 = vmatprep.subr.bf16.mxu0 %v803
    %1026 = vmatpush1.bf16.msra.mxu0 %v802
    %1027 = vmatprep.subr.bf16.mxu0 %v807
    %1028 = vmatpush1.bf16.msra.mxu0 %v806
    %1029 = vmatprep.subr.bf16.mxu0 %v811
    %1030 = vmatpush1.bf16.msra.mxu0 %v810
    %1031 = vmatprep.subr.bf16.mxu0 %v815
    %1032 = vmatpush1.bf16.msra.mxu0 %v814
    %1033 = vmatprep.subr.bf16.mxu0 %v819
    %1034 = vmatpush1.bf16.msra.mxu0 %v818
    %1035 = vmatprep.subr.bf16.mxu0 %v823
    %1036 = vmatpush1.bf16.msra.mxu0 %v822
    %1037 = vmatprep.subr.bf16.mxu0 %v827
    %1038 = vmatpush1.bf16.msra.mxu0 %v826
    %1039 = vmatprep.subr.bf16.mxu0 %v831
    %1040 = vmatpush1.bf16.msra.mxu0 %v830
    %1041 = vmatprep.subr.bf16.mxu0 %v835
    %1042 = vmatpush1.bf16.msra.mxu0 %v834
    %1043 = vmatprep.subr.bf16.mxu0 %v839
    %1044 = vmatpush1.bf16.msra.mxu0 %v838
    %1045 = vmatprep.mubr.bf16.mxu0 %v179
    %1046 = vmatmul.mubr.bf16.gmra.mrb[0].mxu0 %v178
    %v1047 = vpop.f32.mrb[0].mxu0
    %v1048 = vadd.f32 %v1005, %v1047
    %v1049 = vpop.f32.mrb[0].mxu0
    %v1050 = vadd.f32 %v1007, %v1049
    %v1051 = vpop.f32.mrb[0].mxu0
    %v1052 = vadd.f32 %v1009, %v1051
    %v1053 = vpop.f32.mrb[0].mxu0
    %v1054 = vadd.f32 %v1011, %v1053
    %1055 = vdwg.mxu0
    %1056 = vmatprep.subr.bf16.mxu0 %v717
    %1057 = vmatpush1.bf16.msra.mxu0 %v716
    %1058 = vmatprep.subr.bf16.mxu0 %v721
    %1059 = vmatpush1.bf16.msra.mxu0 %v720
    %1060 = vmatprep.subr.bf16.mxu0 %v725
    %1061 = vmatpush1.bf16.msra.mxu0 %v724
    %1062 = vmatprep.subr.bf16.mxu0 %v729
    %1063 = vmatpush1.bf16.msra.mxu0 %v728
    %1064 = vmatprep.subr.bf16.mxu0 %v733
    %1065 = vmatpush1.bf16.msra.mxu0 %v732
    %1066 = vmatprep.subr.bf16.mxu0 %v737
    %1067 = vmatpush1.bf16.msra.mxu0 %v736
    %1068 = vmatprep.subr.bf16.mxu0 %v741
    %1069 = vmatpush1.bf16.msra.mxu0 %v740
    %1070 = vmatprep.subr.bf16.mxu0 %v745
    %1071 = vmatpush1.bf16.msra.mxu0 %v744
    %1072 = vmatprep.subr.bf16.mxu0 %v749
    %1073 = vmatpush1.bf16.msra.mxu0 %v748
    %1074 = vmatprep.subr.bf16.mxu0 %v753
    %1075 = vmatpush1.bf16.msra.mxu0 %v752
    %1076 = vmatprep.subr.bf16.mxu0 %v757
    %1077 = vmatpush1.bf16.msra.mxu0 %v756
    %1078 = vmatprep.subr.bf16.mxu0 %v761
    %1079 = vmatpush1.bf16.msra.mxu0 %v760
    %1080 = vmatprep.subr.bf16.mxu0 %v765
    %1081 = vmatpush1.bf16.msra.mxu0 %v764
    %1082 = vmatprep.subr.bf16.mxu0 %v769
    %1083 = vmatpush1.bf16.msra.mxu0 %v768
    %1084 = vmatprep.subr.bf16.mxu0 %v773
    %1085 = vmatpush1.bf16.msra.mxu0 %v772
    %1086 = vmatprep.subr.bf16.mxu0 %v777
    %1087 = vmatpush1.bf16.msra.mxu0 %v776
    %1088 = vmatprep.mubr.bf16.mxu0 %v177
    %1089 = vmatmul.mubr.bf16.gmra.mrb[0].mxu0 %v176
    %v1090 = vpop.f32.mrb[0].mxu0
    %v1091 = vadd.f32 %v321, %v1090
    %v1092 = vpop.f32.mrb[0].mxu0
    %v1093 = vadd.f32 %v325, %v1092
    %v1094 = vpop.f32.mrb[0].mxu0
    %v1095 = vadd.f32 %v321, %v1094
    %v1096 = vpop.f32.mrb[0].mxu0
    %v1097 = vadd.f32 %v325, %v1096
    %1098 = vdwg.mxu0
    %1099 = vmatprep.subr.bf16.mxu0 %v781
    %1100 = vmatpush1.bf16.msra.mxu0 %v780
    %1101 = vmatprep.subr.bf16.mxu0 %v785
    %1102 = vmatpush1.bf16.msra.mxu0 %v784
    %1103 = vmatprep.subr.bf16.mxu0 %v789
    %1104 = vmatpush1.bf16.msra.mxu0 %v788
    %1105 = vmatprep.subr.bf16.mxu0 %v793
    %1106 = vmatpush1.bf16.msra.mxu0 %v792
    %1107 = vmatprep.subr.bf16.mxu0 %v797
    %1108 = vmatpush1.bf16.msra.mxu0 %v796
    %1109 = vmatprep.subr.bf16.mxu0 %v801
    %1110 = vmatpush1.bf16.msra.mxu0 %v800
    %1111 = vmatprep.subr.bf16.mxu0 %v805
    %1112 = vmatpush1.bf16.msra.mxu0 %v804
    %1113 = vmatprep.subr.bf16.mxu0 %v809
    %1114 = vmatpush1.bf16.msra.mxu0 %v808
    %1115 = vmatprep.subr.bf16.mxu0 %v813
    %1116 = vmatpush1.bf16.msra.mxu0 %v812
    %1117 = vmatprep.subr.bf16.mxu0 %v817
    %1118 = vmatpush1.bf16.msra.mxu0 %v816
    %1119 = vmatprep.subr.bf16.mxu0 %v821
    %1120 = vmatpush1.bf16.msra.mxu0 %v820
    %1121 = vmatprep.subr.bf16.mxu0 %v825
    %1122 = vmatpush1.bf16.msra.mxu0 %v824
    %1123 = vmatprep.subr.bf16.mxu0 %v829
    %1124 = vmatpush1.bf16.msra.mxu0 %v828
    %1125 = vmatprep.subr.bf16.mxu0 %v833
    %1126 = vmatpush1.bf16.msra.mxu0 %v832
    %1127 = vmatprep.subr.bf16.mxu0 %v837
    %1128 = vmatpush1.bf16.msra.mxu0 %v836
    %1129 = vmatprep.subr.bf16.mxu0 %v841
    %1130 = vmatpush1.bf16.msra.mxu0 %v840
    %1131 = vmatprep.mubr.bf16.mxu0 %v179
    %1132 = vmatmul.mubr.bf16.gmra.mrb[0].mxu0 %v178
    %v1133 = vpop.f32.mrb[0].mxu0
    %v1134 = vadd.f32 %v1091, %v1133
    %v1135 = vpop.f32.mrb[0].mxu0
    %v1136 = vadd.f32 %v1093, %v1135
    %v1137 = vpop.f32.mrb[0].mxu0
    %v1138 = vadd.f32 %v1095, %v1137
    %v1139 = vpop.f32.mrb[0].mxu0
    %v1140 = vadd.f32 %v1097, %v1139
    %1141 = vdwg.mxu0
    %v1142 = vmax.f32 %v1048, 0.0
    %v1143 = vmax.f32 %v1050, 0.0
    %v1144 = vmax.f32 %v1134, 0.0
    %v1145 = vmax.f32 %v1136, 0.0
    %v1146 = vmax.f32 %v1052, 0.0
    %v1147 = vmax.f32 %v1054, 0.0
    %v1148 = vmax.f32 %v1138, 0.0
    %v1149 = vmax.f32 %v1140, 0.0
    %v1150 = vpack.c.bf16 %v1146, %v1142
    %v1151 = vpack.c.bf16 %v1147, %v1143
    %v1152 = vpack.c.bf16 %v1148, %v1144
    %v1153 = vpack.c.bf16 %v1149, %v1145
    %v1154 = vld [vmem:[%s5] sm:$0xff]
    %v1155 = vld [vmem:[%s5 + $0x8] sm:$0xff]
    %v1156 = vld [vmem:[%s5 + $0x10] sm:$0xff]
    %v1157 = vld [vmem:[%s5 + $0x18] sm:$0xf]
    %v1158 = vld [vmem:[%s5 + $0x1c] sm:$0xff]
    %v1159 = vld [vmem:[%s5 + $0x24] sm:$0xff]
    %v1160 = vld [vmem:[%s5 + $0x2c] sm:$0xff]
    %v1161 = vld [vmem:[%s5 + $0x34] sm:$0xf]
    %v1162 = vld [vmem:[%s5 + $0x38] sm:$0xff]
    %v1163 = vld [vmem:[%s5 + $0x40] sm:$0xff]
    %v1164 = vld [vmem:[%s5 + $0x48] sm:$0xff]
    %v1165 = vld [vmem:[%s5 + $0x50] sm:$0xf]
    %v1166 = vld [vmem:[%s5 + $0x54] sm:$0xff]
    %v1167 = vld [vmem:[%s5 + $0x5c] sm:$0xff]
    %v1168 = vld [vmem:[%s5 + $0x64] sm:$0xff]
    %v1169 = vld [vmem:[%s5 + $0x6c] sm:$0xf]
    %v1170 = vld [vmem:[%s5 + $0x70] sm:$0xff]
    %v1171 = vld [vmem:[%s5 + $0x78] sm:$0xff]
    %v1172 = vld [vmem:[%s5 + $0x80] sm:$0xff]
    %v1173 = vld [vmem:[%s5 + $0x88] sm:$0xf]
    %v1174 = vld [vmem:[%s5 + $0x8c] sm:$0xff]
    %v1175 = vld [vmem:[%s5 + $0x94] sm:$0xff]
    %v1176 = vld [vmem:[%s5 + $0x9c] sm:$0xff]
    %v1177 = vld [vmem:[%s5 + $0xa4] sm:$0xf]
    %v1178 = vld [vmem:[%s5 + $0xa8] sm:$0xff]
    %v1179 = vld [vmem:[%s5 + $0xb0] sm:$0xff]
    %v1180 = vld [vmem:[%s5 + $0xb8] sm:$0xff]
    %v1181 = vld [vmem:[%s5 + $0xc0] sm:$0xf]
    %v1182 = vld [vmem:[%s5 + $0xc4] sm:$0xff]
    %v1183 = vld [vmem:[%s5 + $0xcc] sm:$0xff]
    %v1184 = vld [vmem:[%s5 + $0xd4] sm:$0xff]
    %v1185 = vld [vmem:[%s5 + $0xdc] sm:$0xf]
    %v1186 = vld [vmem:[%s5 + $0xe0] sm:$0xff]
    %v1187 = vld [vmem:[%s5 + $0xe8] sm:$0xff]
    %v1188 = vld [vmem:[%s5 + $0xf0] sm:$0xff]
    %v1189 = vld [vmem:[%s5 + $0xf8] sm:$0xf]
    %v1190 = vld [vmem:[%s5 + $0xfc] sm:$0xff]
    %v1191 = vld [vmem:[%s5 + $0x104] sm:$0xff]
    %v1192 = vld [vmem:[%s5 + $0x10c] sm:$0xff]
    %v1193 = vld [vmem:[%s5 + $0x114] sm:$0xf]
    %v1194 = vld [vmem:[%s5 + $0x118] sm:$0xff]
    %v1195 = vld [vmem:[%s5 + $0x120] sm:$0xff]
    %v1196 = vld [vmem:[%s5 + $0x128] sm:$0xff]
    %v1197 = vld [vmem:[%s5 + $0x130] sm:$0xf]
    %v1198 = vld [vmem:[%s5 + $0x134] sm:$0xff]
    %v1199 = vld [vmem:[%s5 + $0x13c] sm:$0xff]
    %v1200 = vld [vmem:[%s5 + $0x144] sm:$0xff]
    %v1201 = vld [vmem:[%s5 + $0x14c] sm:$0xf]
    %v1202 = vld [vmem:[%s5 + $0x150] sm:$0xff]
    %v1203 = vld [vmem:[%s5 + $0x158] sm:$0xff]
    %v1204 = vld [vmem:[%s5 + $0x160] sm:$0xff]
    %v1205 = vld [vmem:[%s5 + $0x168] sm:$0xf]
    %v1206 = vld [vmem:[%s5 + $0x16c] sm:$0xff]
    %v1207 = vld [vmem:[%s5 + $0x174] sm:$0xff]
    %v1208 = vld [vmem:[%s5 + $0x17c] sm:$0xff]
    %v1209 = vld [vmem:[%s5 + $0x184] sm:$0xf]
    %v1210 = vld [vmem:[%s5 + $0x188] sm:$0xff]
    %v1211 = vld [vmem:[%s5 + $0x190] sm:$0xff]
    %v1212 = vld [vmem:[%s5 + $0x198] sm:$0xff]
    %v1213 = vld [vmem:[%s5 + $0x1a0] sm:$0xf]
    %v1214 = vld [vmem:[%s5 + $0x1a4] sm:$0xff]
    %v1215 = vld [vmem:[%s5 + $0x1ac] sm:$0xff]
    %v1216 = vld [vmem:[%s5 + $0x1b4] sm:$0xff]
    %v1217 = vld [vmem:[%s5 + $0x1bc] sm:$0xf]
    %v1218 = vld [vmem:[%s5 + $0x1c0] sm:$0xff]
    %v1219 = vld [vmem:[%s5 + $0x1c8] sm:$0xff]
    %v1220 = vld [vmem:[%s5 + $0x1d0] sm:$0xff]
    %v1221 = vld [vmem:[%s5 + $0x1d8] sm:$0xf]
    %v1222 = vld [vmem:[%s5 + $0x1dc] sm:$0xff]
    %v1223 = vld [vmem:[%s5 + $0x1e4] sm:$0xff]
    %v1224 = vld [vmem:[%s5 + $0x1ec] sm:$0xff]
    %v1225 = vld [vmem:[%s5 + $0x1f4] sm:$0xf]
    %v1226 = vld [vmem:[%s5 + $0x1f8] sm:$0xff]
    %v1227 = vld [vmem:[%s5 + $0x200] sm:$0xff]
    %v1228 = vld [vmem:[%s5 + $0x208] sm:$0xff]
    %v1229 = vld [vmem:[%s5 + $0x210] sm:$0xf]
    %v1230 = vld [vmem:[%s5 + $0x214] sm:$0xff]
    %v1231 = vld [vmem:[%s5 + $0x21c] sm:$0xff]
    %v1232 = vld [vmem:[%s5 + $0x224] sm:$0xff]
    %v1233 = vld [vmem:[%s5 + $0x22c] sm:$0xf]
    %v1234 = vld [vmem:[%s5 + $0x230] sm:$0xff]
    %v1235 = vld [vmem:[%s5 + $0x238] sm:$0xff]
    %v1236 = vld [vmem:[%s5 + $0x240] sm:$0xff]
    %v1237 = vld [vmem:[%s5 + $0x248] sm:$0xf]
    %v1238 = vld [vmem:[%s5 + $0x24c] sm:$0xff]
    %v1239 = vld [vmem:[%s5 + $0x254] sm:$0xff]
    %v1240 = vld [vmem:[%s5 + $0x25c] sm:$0xff]
    %v1241 = vld [vmem:[%s5 + $0x264] sm:$0xf]
    %v1242 = vld [vmem:[%s5 + $0x268] sm:$0xff]
    %v1243 = vld [vmem:[%s5 + $0x270] sm:$0xff]
    %v1244 = vld [vmem:[%s5 + $0x278] sm:$0xff]
    %v1245 = vld [vmem:[%s5 + $0x280] sm:$0xf]
    %v1246 = vld [vmem:[%s5 + $0x284] sm:$0xff]
    %v1247 = vld [vmem:[%s5 + $0x28c] sm:$0xff]
    %v1248 = vld [vmem:[%s5 + $0x294] sm:$0xff]
    %v1249 = vld [vmem:[%s5 + $0x29c] sm:$0xf]
    %v1250 = vld [vmem:[%s5 + $0x2a0] sm:$0xff]
    %v1251 = vld [vmem:[%s5 + $0x2a8] sm:$0xff]
    %v1252 = vld [vmem:[%s5 + $0x2b0] sm:$0xff]
    %v1253 = vld [vmem:[%s5 + $0x2b8] sm:$0xf]
    %v1254 = vld [vmem:[%s5 + $0x2bc] sm:$0xff]
    %v1255 = vld [vmem:[%s5 + $0x2c4] sm:$0xff]
    %v1256 = vld [vmem:[%s5 + $0x2cc] sm:$0xff]
    %v1257 = vld [vmem:[%s5 + $0x2d4] sm:$0xf]
    %v1258 = vld [vmem:[%s5 + $0x2d8] sm:$0xff]
    %v1259 = vld [vmem:[%s5 + $0x2e0] sm:$0xff]
    %v1260 = vld [vmem:[%s5 + $0x2e8] sm:$0xff]
    %v1261 = vld [vmem:[%s5 + $0x2f0] sm:$0xf]
    %v1262 = vld [vmem:[%s5 + $0x2f4] sm:$0xff]
    %v1263 = vld [vmem:[%s5 + $0x2fc] sm:$0xff]
    %v1264 = vld [vmem:[%s5 + $0x304] sm:$0xff]
    %v1265 = vld [vmem:[%s5 + $0x30c] sm:$0xf]
    %v1266 = vld [vmem:[%s5 + $0x310] sm:$0xff]
    %v1267 = vld [vmem:[%s5 + $0x318] sm:$0xff]
    %v1268 = vld [vmem:[%s5 + $0x320] sm:$0xff]
    %v1269 = vld [vmem:[%s5 + $0x328] sm:$0xf]
    %v1270 = vld [vmem:[%s5 + $0x32c] sm:$0xff]
    %v1271 = vld [vmem:[%s5 + $0x334] sm:$0xff]
    %v1272 = vld [vmem:[%s5 + $0x33c] sm:$0xff]
    %v1273 = vld [vmem:[%s5 + $0x344] sm:$0xf]
    %v1274 = vld [vmem:[%s5 + $0x348] sm:$0xff]
    %v1275 = vld [vmem:[%s5 + $0x350] sm:$0xff]
    %v1276 = vld [vmem:[%s5 + $0x358] sm:$0xff]
    %v1277 = vld [vmem:[%s5 + $0x360] sm:$0xf]
    %v1278 = vld [vmem:[%s5 + $0x364] sm:$0xff]
    %v1279 = vld [vmem:[%s5 + $0x36c] sm:$0xff]
    %v1280 = vld [vmem:[%s5 + $0x374] sm:$0xff]
    %v1281 = vld [vmem:[%s5 + $0x37c] sm:$0xf]
    %v1282 = vld [vmem:[%s5 + $0x380] sm:$0xff]
    %v1283 = vld [vmem:[%s5 + $0x388] sm:$0xff]
    %v1284 = vld [vmem:[%s5 + $0x390] sm:$0xff]
    %v1285 = vld [vmem:[%s5 + $0x398] sm:$0xf]
    %v1286 = vld [vmem:[%s5 + $0x39c] sm:$0xff]
    %v1287 = vld [vmem:[%s5 + $0x3a4] sm:$0xff]
    %v1288 = vld [vmem:[%s5 + $0x3ac] sm:$0xff]
    %v1289 = vld [vmem:[%s5 + $0x3b4] sm:$0xf]
    %v1290 = vld [vmem:[%s5 + $0x3b8] sm:$0xff]
    %v1291 = vld [vmem:[%s5 + $0x3c0] sm:$0xff]
    %v1292 = vld [vmem:[%s5 + $0x3c8] sm:$0xff]
    %v1293 = vld [vmem:[%s5 + $0x3d0] sm:$0xf]
    %v1294 = vld [vmem:[%s5 + $0x3d4] sm:$0xff]
    %v1295 = vld [vmem:[%s5 + $0x3dc] sm:$0xff]
    %v1296 = vld [vmem:[%s5 + $0x3e4] sm:$0xff]
    %v1297 = vld [vmem:[%s5 + $0x3ec] sm:$0xf]
    %v1298 = vld [vmem:[%s5 + $0x3f0] sm:$0xff]
    %v1299 = vld [vmem:[%s5 + $0x3f8] sm:$0xff]
    %v1300 = vld [vmem:[%s5 + $0x400] sm:$0xff]
    %v1301 = vld [vmem:[%s5 + $0x408] sm:$0xf]
    %v1302 = vld [vmem:[%s5 + $0x40c] sm:$0xff]
    %v1303 = vld [vmem:[%s5 + $0x414] sm:$0xff]
    %v1304 = vld [vmem:[%s5 + $0x41c] sm:$0xff]
    %v1305 = vld [vmem:[%s5 + $0x424] sm:$0xf]
    %v1306 = vld [vmem:[%s5 + $0x428] sm:$0xff]
    %v1307 = vld [vmem:[%s5 + $0x430] sm:$0xff]
    %v1308 = vld [vmem:[%s5 + $0x438] sm:$0xff]
    %v1309 = vld [vmem:[%s5 + $0x440] sm:$0xf]
    %v1310 = vld [vmem:[%s5 + $0x444] sm:$0xff]
    %v1311 = vld [vmem:[%s5 + $0x44c] sm:$0xff]
    %v1312 = vld [vmem:[%s5 + $0x454] sm:$0xff]
    %v1313 = vld [vmem:[%s5 + $0x45c] sm:$0xf]
    %v1314 = vld [vmem:[%s5 + $0x460] sm:$0xff]
    %v1315 = vld [vmem:[%s5 + $0x468] sm:$0xff]
    %v1316 = vld [vmem:[%s5 + $0x470] sm:$0xff]
    %v1317 = vld [vmem:[%s5 + $0x478] sm:$0xf]
    %v1318 = vld [vmem:[%s5 + $0x47c] sm:$0xff]
    %v1319 = vld [vmem:[%s5 + $0x484] sm:$0xff]
    %v1320 = vld [vmem:[%s5 + $0x48c] sm:$0xff]
    %v1321 = vld [vmem:[%s5 + $0x494] sm:$0xf]
    %v1322 = vld [vmem:[%s5 + $0x498] sm:$0xff]
    %v1323 = vld [vmem:[%s5 + $0x4a0] sm:$0xff]
    %v1324 = vld [vmem:[%s5 + $0x4a8] sm:$0xff]
    %v1325 = vld [vmem:[%s5 + $0x4b0] sm:$0xf]
    %v1326 = vld [vmem:[%s5 + $0x4b4] sm:$0xff]
    %v1327 = vld [vmem:[%s5 + $0x4bc] sm:$0xff]
    %v1328 = vld [vmem:[%s5 + $0x4c4] sm:$0xff]
    %v1329 = vld [vmem:[%s5 + $0x4cc] sm:$0xf]
    %v1330 = vld [vmem:[%s5 + $0x4d0] sm:$0xff]
    %v1331 = vld [vmem:[%s5 + $0x4d8] sm:$0xff]
    %v1332 = vld [vmem:[%s5 + $0x4e0] sm:$0xff]
    %v1333 = vld [vmem:[%s5 + $0x4e8] sm:$0xf]
    %v1334 = vld [vmem:[%s5 + $0x4ec] sm:$0xff]
    %v1335 = vld [vmem:[%s5 + $0x4f4] sm:$0xff]
    %v1336 = vld [vmem:[%s5 + $0x4fc] sm:$0xff]
    %v1337 = vld [vmem:[%s5 + $0x504] sm:$0xf]
    %v1338 = vld [vmem:[%s5 + $0x508] sm:$0xff]
    %v1339 = vld [vmem:[%s5 + $0x510] sm:$0xff]
    %v1340 = vld [vmem:[%s5 + $0x518] sm:$0xff]
    %v1341 = vld [vmem:[%s5 + $0x520] sm:$0xf]
    %v1342 = vld [vmem:[%s5 + $0x524] sm:$0xff]
    %v1343 = vld [vmem:[%s5 + $0x52c] sm:$0xff]
    %v1344 = vld [vmem:[%s5 + $0x534] sm:$0xff]
    %v1345 = vld [vmem:[%s5 + $0x53c] sm:$0xf]
    %v1346 = vld [vmem:[%s5 + $0x540] sm:$0xff]
    %v1347 = vld [vmem:[%s5 + $0x548] sm:$0xff]
    %v1348 = vld [vmem:[%s5 + $0x550] sm:$0xff]
    %v1349 = vld [vmem:[%s5 + $0x558] sm:$0xf]
    %v1350 = vld [vmem:[%s5 + $0x55c] sm:$0xff]
    %v1351 = vld [vmem:[%s5 + $0x564] sm:$0xff]
    %v1352 = vld [vmem:[%s5 + $0x56c] sm:$0xff]
    %v1353 = vld [vmem:[%s5 + $0x574] sm:$0xf]
    %v1354 = vld [vmem:[%s5 + $0x578] sm:$0xff]
    %v1355 = vld [vmem:[%s5 + $0x580] sm:$0xff]
    %v1356 = vld [vmem:[%s5 + $0x588] sm:$0xff]
    %v1357 = vld [vmem:[%s5 + $0x590] sm:$0xf]
    %v1358 = vld [vmem:[%s5 + $0x594] sm:$0xff]
    %v1359 = vld [vmem:[%s5 + $0x59c] sm:$0xff]
    %v1360 = vld [vmem:[%s5 + $0x5a4] sm:$0xff]
    %v1361 = vld [vmem:[%s5 + $0x5ac] sm:$0xf]
    %v1362 = vld [vmem:[%s5 + $0x5b0] sm:$0xff]
    %v1363 = vld [vmem:[%s5 + $0x5b8] sm:$0xff]
    %v1364 = vld [vmem:[%s5 + $0x5c0] sm:$0xff]
    %v1365 = vld [vmem:[%s5 + $0x5c8] sm:$0xf]
    %v1366 = vld [vmem:[%s5 + $0x5cc] sm:$0xff]
    %v1367 = vld [vmem:[%s5 + $0x5d4] sm:$0xff]
    %v1368 = vld [vmem:[%s5 + $0x5dc] sm:$0xff]
    %v1369 = vld [vmem:[%s5 + $0x5e4] sm:$0xf]
    %v1370 = vld [vmem:[%s5 + $0x5e8] sm:$0xff]
    %v1371 = vld [vmem:[%s5 + $0x5f0] sm:$0xff]
    %v1372 = vld [vmem:[%s5 + $0x5f8] sm:$0xff]
    %v1373 = vld [vmem:[%s5 + $0x600] sm:$0xf]
    %v1374 = vld [vmem:[%s5 + $0x604] sm:$0xff]
    %v1375 = vld [vmem:[%s5 + $0x60c] sm:$0xff]
    %v1376 = vld [vmem:[%s5 + $0x614] sm:$0xff]
    %v1377 = vld [vmem:[%s5 + $0x61c] sm:$0xf]
    %v1378 = vld [vmem:[%s5 + $0x620] sm:$0xff]
    %v1379 = vld [vmem:[%s5 + $0x628] sm:$0xff]
    %v1380 = vld [vmem:[%s5 + $0x630] sm:$0xff]
    %v1381 = vld [vmem:[%s5 + $0x638] sm:$0xf]
    %v1382 = vld [vmem:[%s5 + $0x63c] sm:$0xff]
    %v1383 = vld [vmem:[%s5 + $0x644] sm:$0xff]
    %v1384 = vld [vmem:[%s5 + $0x64c] sm:$0xff]
    %v1385 = vld [vmem:[%s5 + $0x654] sm:$0xf]
    %v1386 = vld [vmem:[%s5 + $0x658] sm:$0xff]
    %v1387 = vld [vmem:[%s5 + $0x660] sm:$0xff]
    %v1388 = vld [vmem:[%s5 + $0x668] sm:$0xff]
    %v1389 = vld [vmem:[%s5 + $0x670] sm:$0xf]
    %v1390 = vld [vmem:[%s5 + $0x674] sm:$0xff]
    %v1391 = vld [vmem:[%s5 + $0x67c] sm:$0xff]
    %v1392 = vld [vmem:[%s5 + $0x684] sm:$0xff]
    %v1393 = vld [vmem:[%s5 + $0x68c] sm:$0xf]
    %v1394 = vld [vmem:[%s5 + $0x690] sm:$0xff]
    %v1395 = vld [vmem:[%s5 + $0x698] sm:$0xff]
    %v1396 = vld [vmem:[%s5 + $0x6a0] sm:$0xff]
    %v1397 = vld [vmem:[%s5 + $0x6a8] sm:$0xf]
    %v1398 = vld [vmem:[%s5 + $0x6ac] sm:$0xff]
    %v1399 = vld [vmem:[%s5 + $0x6b4] sm:$0xff]
    %v1400 = vld [vmem:[%s5 + $0x6bc] sm:$0xff]
    %v1401 = vld [vmem:[%s5 + $0x6c4] sm:$0xf]
    %v1402 = vld [vmem:[%s5 + $0x6c8] sm:$0xff]
    %v1403 = vld [vmem:[%s5 + $0x6d0] sm:$0xff]
    %v1404 = vld [vmem:[%s5 + $0x6d8] sm:$0xff]
    %v1405 = vld [vmem:[%s5 + $0x6e0] sm:$0xf]
    %v1406 = vld [vmem:[%s5 + $0x6e4] sm:$0xff]
    %v1407 = vld [vmem:[%s5 + $0x6ec] sm:$0xff]
    %v1408 = vld [vmem:[%s5 + $0x6f4] sm:$0xff]
    %v1409 = vld [vmem:[%s5 + $0x6fc] sm:$0xf]
    %v1410 = vld [vmem:[%s6] sm:$0x7f]
    %v1412 = vlaneseq
    %v1413 = vshrl.u32 %v1412, 7
    %v1414 = vsub.s32 0, %v1413
    %v1415 = vrot.slane %v1410, %v1414
    %v1416 = vlaneseq
    %v1417 = vshrl.u32 %v1416, 7
    %v1418 = vsub.s32 1, %v1417
    %v1419 = vrot.slane %v1410, %v1418
    %v1420 = vlaneseq
    %v1421 = vshrl.u32 %v1420, 7
    %v1422 = vsub.s32 2, %v1421
    %v1423 = vrot.slane %v1410, %v1422
    %v1424 = vlaneseq
    %v1425 = vshrl.u32 %v1424, 7
    %v1426 = vsub.s32 3, %v1425
    %v1427 = vrot.slane %v1410, %v1426
    %v1428 = vlaneseq
    %v1429 = vshrl.u32 %v1428, 7
    %v1430 = vsub.s32 4, %v1429
    %v1431 = vrot.slane %v1410, %v1430
    %v1432 = vlaneseq
    %v1433 = vshrl.u32 %v1432, 7
    %v1434 = vsub.s32 5, %v1433
    %v1435 = vrot.slane %v1410, %v1434
    %v1436 = vlaneseq
    %v1437 = vshrl.u32 %v1436, 7
    %v1438 = vsub.s32 6, %v1437
    %v1439 = vrot.slane %v1410, %v1438
    %v1703 = vunpack.c.l.b16 %v1154
    %v1704 = vunpack.c.h.b16 %v1154
    %v1705 = vunpack.c.l.b16 %v1155
    %v1706 = vunpack.c.h.b16 %v1155
    %v1707 = vunpack.c.l.b16 %v1156
    %v1708 = vunpack.c.h.b16 %v1156
    %v1709 = vunpack.c.l.b16 %v1157
    %v1710 = vunpack.c.l.b16 %v1158
    %v1711 = vunpack.c.h.b16 %v1158
    %v1712 = vunpack.c.l.b16 %v1159
    %v1713 = vunpack.c.h.b16 %v1159
    %v1714 = vunpack.c.l.b16 %v1160
    %v1715 = vunpack.c.h.b16 %v1160
    %v1716 = vunpack.c.l.b16 %v1161
    %v1717 = vunpack.c.l.b16 %v1162
    %v1718 = vunpack.c.h.b16 %v1162
    %v1719 = vunpack.c.l.b16 %v1163
    %v1720 = vunpack.c.h.b16 %v1163
    %v1721 = vunpack.c.l.b16 %v1164
    %v1722 = vunpack.c.h.b16 %v1164
    %v1723 = vunpack.c.l.b16 %v1165
    %v1724 = vunpack.c.l.b16 %v1166
    %v1725 = vunpack.c.h.b16 %v1166
    %v1726 = vunpack.c.l.b16 %v1167
    %v1727 = vunpack.c.h.b16 %v1167
    %v1728 = vunpack.c.l.b16 %v1168
    %v1729 = vunpack.c.h.b16 %v1168
    %v1730 = vunpack.c.l.b16 %v1169
    %v1731 = vunpack.c.l.b16 %v1170
    %v1732 = vunpack.c.h.b16 %v1170
    %v1733 = vunpack.c.l.b16 %v1171
    %v1734 = vunpack.c.h.b16 %v1171
    %v1735 = vunpack.c.l.b16 %v1172
    %v1736 = vunpack.c.h.b16 %v1172
    %v1737 = vunpack.c.l.b16 %v1173
    %v1738 = vunpack.c.l.b16 %v1174
    %v1739 = vunpack.c.h.b16 %v1174
    %v1740 = vunpack.c.l.b16 %v1175
    %v1741 = vunpack.c.h.b16 %v1175
    %v1742 = vunpack.c.l.b16 %v1176
    %v1743 = vunpack.c.h.b16 %v1176
    %v1744 = vunpack.c.l.b16 %v1177
    %v1745 = vunpack.c.l.b16 %v1178
    %v1746 = vunpack.c.h.b16 %v1178
    %v1747 = vunpack.c.l.b16 %v1179
    %v1748 = vunpack.c.h.b16 %v1179
    %v1749 = vunpack.c.l.b16 %v1180
    %v1750 = vunpack.c.h.b16 %v1180
    %v1751 = vunpack.c.l.b16 %v1181
    %v1752 = vunpack.c.l.b16 %v1182
    %v1753 = vunpack.c.h.b16 %v1182
    %v1754 = vunpack.c.l.b16 %v1183
    %v1755 = vunpack.c.h.b16 %v1183
    %v1756 = vunpack.c.l.b16 %v1184
    %v1757 = vunpack.c.h.b16 %v1184
    %v1758 = vunpack.c.l.b16 %v1185
    %v1759 = vunpack.c.l.b16 %v1186
    %v1760 = vunpack.c.h.b16 %v1186
    %v1761 = vunpack.c.l.b16 %v1187
    %v1762 = vunpack.c.h.b16 %v1187
    %v1763 = vunpack.c.l.b16 %v1188
    %v1764 = vunpack.c.h.b16 %v1188
    %v1765 = vunpack.c.l.b16 %v1189
    %v1766 = vunpack.c.l.b16 %v1190
    %v1767 = vunpack.c.h.b16 %v1190
    %v1768 = vunpack.c.l.b16 %v1191
    %v1769 = vunpack.c.h.b16 %v1191
    %v1770 = vunpack.c.l.b16 %v1192
    %v1771 = vunpack.c.h.b16 %v1192
    %v1772 = vunpack.c.l.b16 %v1193
    %v1773 = vunpack.c.l.b16 %v1194
    %v1774 = vunpack.c.h.b16 %v1194
    %v1775 = vunpack.c.l.b16 %v1195
    %v1776 = vunpack.c.h.b16 %v1195
    %v1777 = vunpack.c.l.b16 %v1196
    %v1778 = vunpack.c.h.b16 %v1196
    %v1779 = vunpack.c.l.b16 %v1197
    %v1780 = vunpack.c.l.b16 %v1198
    %v1781 = vunpack.c.h.b16 %v1198
    %v1782 = vunpack.c.l.b16 %v1199
    %v1783 = vunpack.c.h.b16 %v1199
    %v1784 = vunpack.c.l.b16 %v1200
    %v1785 = vunpack.c.h.b16 %v1200
    %v1786 = vunpack.c.l.b16 %v1201
    %v1787 = vunpack.c.l.b16 %v1202
    %v1788 = vunpack.c.h.b16 %v1202
    %v1789 = vunpack.c.l.b16 %v1203
    %v1790 = vunpack.c.h.b16 %v1203
    %v1791 = vunpack.c.l.b16 %v1204
    %v1792 = vunpack.c.h.b16 %v1204
    %v1793 = vunpack.c.l.b16 %v1205
    %v1794 = vunpack.c.l.b16 %v1206
    %v1795 = vunpack.c.h.b16 %v1206
    %v1796 = vunpack.c.l.b16 %v1207
    %v1797 = vunpack.c.h.b16 %v1207
    %v1798 = vunpack.c.l.b16 %v1208
    %v1799 = vunpack.c.h.b16 %v1208
    %v1800 = vunpack.c.l.b16 %v1209
    %v1801 = vunpack.c.l.b16 %v1210
    %v1802 = vunpack.c.h.b16 %v1210
    %v1803 = vunpack.c.l.b16 %v1211
    %v1804 = vunpack.c.h.b16 %v1211
    %v1805 = vunpack.c.l.b16 %v1212
    %v1806 = vunpack.c.h.b16 %v1212
    %v1807 = vunpack.c.l.b16 %v1213
    %v1808 = vunpack.c.l.b16 %v1214
    %v1809 = vunpack.c.h.b16 %v1214
    %v1810 = vunpack.c.l.b16 %v1215
    %v1811 = vunpack.c.h.b16 %v1215
    %v1812 = vunpack.c.l.b16 %v1216
    %v1813 = vunpack.c.h.b16 %v1216
    %v1814 = vunpack.c.l.b16 %v1217
    %v1815 = vunpack.c.l.b16 %v1218
    %v1816 = vunpack.c.h.b16 %v1218
    %v1817 = vunpack.c.l.b16 %v1219
    %v1818 = vunpack.c.h.b16 %v1219
    %v1819 = vunpack.c.l.b16 %v1220
    %v1820 = vunpack.c.h.b16 %v1220
    %v1821 = vunpack.c.l.b16 %v1221
    %v1822 = vunpack.c.l.b16 %v1222
    %v1823 = vunpack.c.h.b16 %v1222
    %v1824 = vunpack.c.l.b16 %v1223
    %v1825 = vunpack.c.h.b16 %v1223
    %v1826 = vunpack.c.l.b16 %v1224
    %v1827 = vunpack.c.h.b16 %v1224
    %v1828 = vunpack.c.l.b16 %v1225
    %v1829 = vunpack.c.l.b16 %v1226
    %v1830 = vunpack.c.h.b16 %v1226
    %v1831 = vunpack.c.l.b16 %v1227
    %v1832 = vunpack.c.h.b16 %v1227
    %v1833 = vunpack.c.l.b16 %v1228
    %v1834 = vunpack.c.h.b16 %v1228
    %v1835 = vunpack.c.l.b16 %v1229
    %v1836 = vunpack.c.l.b16 %v1230
    %v1837 = vunpack.c.h.b16 %v1230
    %v1838 = vunpack.c.l.b16 %v1231
    %v1839 = vunpack.c.h.b16 %v1231
    %v1840 = vunpack.c.l.b16 %v1232
    %v1841 = vunpack.c.h.b16 %v1232
    %v1842 = vunpack.c.l.b16 %v1233
    %v1843 = vunpack.c.l.b16 %v1234
    %v1844 = vunpack.c.h.b16 %v1234
    %v1845 = vunpack.c.l.b16 %v1235
    %v1846 = vunpack.c.h.b16 %v1235
    %v1847 = vunpack.c.l.b16 %v1236
    %v1848 = vunpack.c.h.b16 %v1236
    %v1849 = vunpack.c.l.b16 %v1237
    %v1850 = vunpack.c.l.b16 %v1238
    %v1851 = vunpack.c.h.b16 %v1238
    %v1852 = vunpack.c.l.b16 %v1239
    %v1853 = vunpack.c.h.b16 %v1239
    %v1854 = vunpack.c.l.b16 %v1240
    %v1855 = vunpack.c.h.b16 %v1240
    %v1856 = vunpack.c.l.b16 %v1241
    %v1857 = vunpack.c.l.b16 %v1242
    %v1858 = vunpack.c.h.b16 %v1242
    %v1859 = vunpack.c.l.b16 %v1243
    %v1860 = vunpack.c.h.b16 %v1243
    %v1861 = vunpack.c.l.b16 %v1244
    %v1862 = vunpack.c.h.b16 %v1244
    %v1863 = vunpack.c.l.b16 %v1245
    %v1864 = vunpack.c.l.b16 %v1246
    %v1865 = vunpack.c.h.b16 %v1246
    %v1866 = vunpack.c.l.b16 %v1247
    %v1867 = vunpack.c.h.b16 %v1247
    %v1868 = vunpack.c.l.b16 %v1248
    %v1869 = vunpack.c.h.b16 %v1248
    %v1870 = vunpack.c.l.b16 %v1249
    %v1871 = vunpack.c.l.b16 %v1250
    %v1872 = vunpack.c.h.b16 %v1250
    %v1873 = vunpack.c.l.b16 %v1251
    %v1874 = vunpack.c.h.b16 %v1251
    %v1875 = vunpack.c.l.b16 %v1252
    %v1876 = vunpack.c.h.b16 %v1252
    %v1877 = vunpack.c.l.b16 %v1253
    %v1878 = vunpack.c.l.b16 %v1254
    %v1879 = vunpack.c.h.b16 %v1254
    %v1880 = vunpack.c.l.b16 %v1255
    %v1881 = vunpack.c.h.b16 %v1255
    %v1882 = vunpack.c.l.b16 %v1256
    %v1883 = vunpack.c.h.b16 %v1256
    %v1884 = vunpack.c.l.b16 %v1257
    %v1885 = vunpack.c.l.b16 %v1258
    %v1886 = vunpack.c.h.b16 %v1258
    %v1887 = vunpack.c.l.b16 %v1259
    %v1888 = vunpack.c.h.b16 %v1259
    %v1889 = vunpack.c.l.b16 %v1260
    %v1890 = vunpack.c.h.b16 %v1260
    %v1891 = vunpack.c.l.b16 %v1261
    %v1892 = vunpack.c.l.b16 %v1262
    %v1893 = vunpack.c.h.b16 %v1262
    %v1894 = vunpack.c.l.b16 %v1263
    %v1895 = vunpack.c.h.b16 %v1263
    %v1896 = vunpack.c.l.b16 %v1264
    %v1897 = vunpack.c.h.b16 %v1264
    %v1898 = vunpack.c.l.b16 %v1265
    %v1899 = vunpack.c.l.b16 %v1266
    %v1900 = vunpack.c.h.b16 %v1266
    %v1901 = vunpack.c.l.b16 %v1267
    %v1902 = vunpack.c.h.b16 %v1267
    %v1903 = vunpack.c.l.b16 %v1268
    %v1904 = vunpack.c.h.b16 %v1268
    %v1905 = vunpack.c.l.b16 %v1269
    %v1906 = vunpack.c.l.b16 %v1270
    %v1907 = vunpack.c.h.b16 %v1270
    %v1908 = vunpack.c.l.b16 %v1271
    %v1909 = vunpack.c.h.b16 %v1271
    %v1910 = vunpack.c.l.b16 %v1272
    %v1911 = vunpack.c.h.b16 %v1272
    %v1912 = vunpack.c.l.b16 %v1273
    %v1913 = vunpack.c.l.b16 %v1274
    %v1914 = vunpack.c.h.b16 %v1274
    %v1915 = vunpack.c.l.b16 %v1275
    %v1916 = vunpack.c.h.b16 %v1275
    %v1917 = vunpack.c.l.b16 %v1276
    %v1918 = vunpack.c.h.b16 %v1276
    %v1919 = vunpack.c.l.b16 %v1277
    %v1920 = vunpack.c.l.b16 %v1278
    %v1921 = vunpack.c.h.b16 %v1278
    %v1922 = vunpack.c.l.b16 %v1279
    %v1923 = vunpack.c.h.b16 %v1279
    %v1924 = vunpack.c.l.b16 %v1280
    %v1925 = vunpack.c.h.b16 %v1280
    %v1926 = vunpack.c.l.b16 %v1281
    %v1927 = vunpack.c.l.b16 %v1282
    %v1928 = vunpack.c.h.b16 %v1282
    %v1929 = vunpack.c.l.b16 %v1283
    %v1930 = vunpack.c.h.b16 %v1283
    %v1931 = vunpack.c.l.b16 %v1284
    %v1932 = vunpack.c.h.b16 %v1284
    %v1933 = vunpack.c.l.b16 %v1285
    %v1934 = vunpack.c.l.b16 %v1286
    %v1935 = vunpack.c.h.b16 %v1286
    %v1936 = vunpack.c.l.b16 %v1287
    %v1937 = vunpack.c.h.b16 %v1287
    %v1938 = vunpack.c.l.b16 %v1288
    %v1939 = vunpack.c.h.b16 %v1288
    %v1940 = vunpack.c.l.b16 %v1289
    %v1941 = vunpack.c.l.b16 %v1290
    %v1942 = vunpack.c.h.b16 %v1290
    %v1943 = vunpack.c.l.b16 %v1291
    %v1944 = vunpack.c.h.b16 %v1291
    %v1945 = vunpack.c.l.b16 %v1292
    %v1946 = vunpack.c.h.b16 %v1292
    %v1947 = vunpack.c.l.b16 %v1293
    %v1948 = vunpack.c.l.b16 %v1294
    %v1949 = vunpack.c.h.b16 %v1294
    %v1950 = vunpack.c.l.b16 %v1295
    %v1951 = vunpack.c.h.b16 %v1295
    %v1952 = vunpack.c.l.b16 %v1296
    %v1953 = vunpack.c.h.b16 %v1296
    %v1954 = vunpack.c.l.b16 %v1297
    %v1955 = vunpack.c.l.b16 %v1298
    %v1956 = vunpack.c.h.b16 %v1298
    %v1957 = vunpack.c.l.b16 %v1299
    %v1958 = vunpack.c.h.b16 %v1299
    %v1959 = vunpack.c.l.b16 %v1300
    %v1960 = vunpack.c.h.b16 %v1300
    %v1961 = vunpack.c.l.b16 %v1301
    %v1962 = vunpack.c.l.b16 %v1302
    %v1963 = vunpack.c.h.b16 %v1302
    %v1964 = vunpack.c.l.b16 %v1303
    %v1965 = vunpack.c.h.b16 %v1303
    %v1966 = vunpack.c.l.b16 %v1304
    %v1967 = vunpack.c.h.b16 %v1304
    %v1968 = vunpack.c.l.b16 %v1305
    %v1969 = vunpack.c.l.b16 %v1306
    %v1970 = vunpack.c.h.b16 %v1306
    %v1971 = vunpack.c.l.b16 %v1307
    %v1972 = vunpack.c.h.b16 %v1307
    %v1973 = vunpack.c.l.b16 %v1308
    %v1974 = vunpack.c.h.b16 %v1308
    %v1975 = vunpack.c.l.b16 %v1309
    %v1976 = vunpack.c.l.b16 %v1310
    %v1977 = vunpack.c.h.b16 %v1310
    %v1978 = vunpack.c.l.b16 %v1311
    %v1979 = vunpack.c.h.b16 %v1311
    %v1980 = vunpack.c.l.b16 %v1312
    %v1981 = vunpack.c.h.b16 %v1312
    %v1982 = vunpack.c.l.b16 %v1313
    %v1983 = vunpack.c.l.b16 %v1314
    %v1984 = vunpack.c.h.b16 %v1314
    %v1985 = vunpack.c.l.b16 %v1315
    %v1986 = vunpack.c.h.b16 %v1315
    %v1987 = vunpack.c.l.b16 %v1316
    %v1988 = vunpack.c.h.b16 %v1316
    %v1989 = vunpack.c.l.b16 %v1317
    %v1990 = vunpack.c.l.b16 %v1318
    %v1991 = vunpack.c.h.b16 %v1318
    %v1992 = vunpack.c.l.b16 %v1319
    %v1993 = vunpack.c.h.b16 %v1319
    %v1994 = vunpack.c.l.b16 %v1320
    %v1995 = vunpack.c.h.b16 %v1320
    %v1996 = vunpack.c.l.b16 %v1321
    %v1997 = vunpack.c.l.b16 %v1322
    %v1998 = vunpack.c.h.b16 %v1322
    %v1999 = vunpack.c.l.b16 %v1323
    %v2000 = vunpack.c.h.b16 %v1323
    %v2001 = vunpack.c.l.b16 %v1324
    %v2002 = vunpack.c.h.b16 %v1324
    %v2003 = vunpack.c.l.b16 %v1325
    %v2004 = vunpack.c.l.b16 %v1326
    %v2005 = vunpack.c.h.b16 %v1326
    %v2006 = vunpack.c.l.b16 %v1327
    %v2007 = vunpack.c.h.b16 %v1327
    %v2008 = vunpack.c.l.b16 %v1328
    %v2009 = vunpack.c.h.b16 %v1328
    %v2010 = vunpack.c.l.b16 %v1329
    %v2011 = vunpack.c.l.b16 %v1330
    %v2012 = vunpack.c.h.b16 %v1330
    %v2013 = vunpack.c.l.b16 %v1331
    %v2014 = vunpack.c.h.b16 %v1331
    %v2015 = vunpack.c.l.b16 %v1332
    %v2016 = vunpack.c.h.b16 %v1332
    %v2017 = vunpack.c.l.b16 %v1333
    %v2018 = vunpack.c.l.b16 %v1334
    %v2019 = vunpack.c.h.b16 %v1334
    %v2020 = vunpack.c.l.b16 %v1335
    %v2021 = vunpack.c.h.b16 %v1335
    %v2022 = vunpack.c.l.b16 %v1336
    %v2023 = vunpack.c.h.b16 %v1336
    %v2024 = vunpack.c.l.b16 %v1337
    %v2025 = vunpack.c.l.b16 %v1338
    %v2026 = vunpack.c.h.b16 %v1338
    %v2027 = vunpack.c.l.b16 %v1339
    %v2028 = vunpack.c.h.b16 %v1339
    %v2029 = vunpack.c.l.b16 %v1340
    %v2030 = vunpack.c.h.b16 %v1340
    %v2031 = vunpack.c.l.b16 %v1341
    %v2032 = vunpack.c.l.b16 %v1342
    %v2033 = vunpack.c.h.b16 %v1342
    %v2034 = vunpack.c.l.b16 %v1343
    %v2035 = vunpack.c.h.b16 %v1343
    %v2036 = vunpack.c.l.b16 %v1344
    %v2037 = vunpack.c.h.b16 %v1344
    %v2038 = vunpack.c.l.b16 %v1345
    %v2039 = vunpack.c.l.b16 %v1346
    %v2040 = vunpack.c.h.b16 %v1346
    %v2041 = vunpack.c.l.b16 %v1347
    %v2042 = vunpack.c.h.b16 %v1347
    %v2043 = vunpack.c.l.b16 %v1348
    %v2044 = vunpack.c.h.b16 %v1348
    %v2045 = vunpack.c.l.b16 %v1349
    %v2046 = vunpack.c.l.b16 %v1350
    %v2047 = vunpack.c.h.b16 %v1350
    %v2048 = vunpack.c.l.b16 %v1351
    %v2049 = vunpack.c.h.b16 %v1351
    %v2050 = vunpack.c.l.b16 %v1352
    %v2051 = vunpack.c.h.b16 %v1352
    %v2052 = vunpack.c.l.b16 %v1353
    %v2053 = vunpack.c.l.b16 %v1354
    %v2054 = vunpack.c.h.b16 %v1354
    %v2055 = vunpack.c.l.b16 %v1355
    %v2056 = vunpack.c.h.b16 %v1355
    %v2057 = vunpack.c.l.b16 %v1356
    %v2058 = vunpack.c.h.b16 %v1356
    %v2059 = vunpack.c.l.b16 %v1357
    %v2060 = vunpack.c.l.b16 %v1358
    %v2061 = vunpack.c.h.b16 %v1358
    %v2062 = vunpack.c.l.b16 %v1359
    %v2063 = vunpack.c.h.b16 %v1359
    %v2064 = vunpack.c.l.b16 %v1360
    %v2065 = vunpack.c.h.b16 %v1360
    %v2066 = vunpack.c.l.b16 %v1361
    %v2067 = vunpack.c.l.b16 %v1362
    %v2068 = vunpack.c.h.b16 %v1362
    %v2069 = vunpack.c.l.b16 %v1363
    %v2070 = vunpack.c.h.b16 %v1363
    %v2071 = vunpack.c.l.b16 %v1364
    %v2072 = vunpack.c.h.b16 %v1364
    %v2073 = vunpack.c.l.b16 %v1365
    %v2074 = vunpack.c.l.b16 %v1366
    %v2075 = vunpack.c.h.b16 %v1366
    %v2076 = vunpack.c.l.b16 %v1367
    %v2077 = vunpack.c.h.b16 %v1367
    %v2078 = vunpack.c.l.b16 %v1368
    %v2079 = vunpack.c.h.b16 %v1368
    %v2080 = vunpack.c.l.b16 %v1369
    %v2081 = vunpack.c.l.b16 %v1370
    %v2082 = vunpack.c.h.b16 %v1370
    %v2083 = vunpack.c.l.b16 %v1371
    %v2084 = vunpack.c.h.b16 %v1371
    %v2085 = vunpack.c.l.b16 %v1372
    %v2086 = vunpack.c.h.b16 %v1372
    %v2087 = vunpack.c.l.b16 %v1373
    %v2088 = vunpack.c.l.b16 %v1374
    %v2089 = vunpack.c.h.b16 %v1374
    %v2090 = vunpack.c.l.b16 %v1375
    %v2091 = vunpack.c.h.b16 %v1375
    %v2092 = vunpack.c.l.b16 %v1376
    %v2093 = vunpack.c.h.b16 %v1376
    %v2094 = vunpack.c.l.b16 %v1377
    %v2095 = vunpack.c.l.b16 %v1378
    %v2096 = vunpack.c.h.b16 %v1378
    %v2097 = vunpack.c.l.b16 %v1379
    %v2098 = vunpack.c.h.b16 %v1379
    %v2099 = vunpack.c.l.b16 %v1380
    %v2100 = vunpack.c.h.b16 %v1380
    %v2101 = vunpack.c.l.b16 %v1381
    %v2102 = vunpack.c.l.b16 %v1382
    %v2103 = vunpack.c.h.b16 %v1382
    %v2104 = vunpack.c.l.b16 %v1383
    %v2105 = vunpack.c.h.b16 %v1383
    %v2106 = vunpack.c.l.b16 %v1384
    %v2107 = vunpack.c.h.b16 %v1384
    %v2108 = vunpack.c.l.b16 %v1385
    %v2109 = vunpack.c.l.b16 %v1386
    %v2110 = vunpack.c.h.b16 %v1386
    %v2111 = vunpack.c.l.b16 %v1387
    %v2112 = vunpack.c.h.b16 %v1387
    %v2113 = vunpack.c.l.b16 %v1388
    %v2114 = vunpack.c.h.b16 %v1388
    %v2115 = vunpack.c.l.b16 %v1389
    %v2116 = vunpack.c.l.b16 %v1390
    %v2117 = vunpack.c.h.b16 %v1390
    %v2118 = vunpack.c.l.b16 %v1391
    %v2119 = vunpack.c.h.b16 %v1391
    %v2120 = vunpack.c.l.b16 %v1392
    %v2121 = vunpack.c.h.b16 %v1392
    %v2122 = vunpack.c.l.b16 %v1393
    %v2123 = vunpack.c.l.b16 %v1394
    %v2124 = vunpack.c.h.b16 %v1394
    %v2125 = vunpack.c.l.b16 %v1395
    %v2126 = vunpack.c.h.b16 %v1395
    %v2127 = vunpack.c.l.b16 %v1396
    %v2128 = vunpack.c.h.b16 %v1396
    %v2129 = vunpack.c.l.b16 %v1397
    %v2130 = vunpack.c.l.b16 %v1398
    %v2131 = vunpack.c.h.b16 %v1398
    %v2132 = vunpack.c.l.b16 %v1399
    %v2133 = vunpack.c.h.b16 %v1399
    %v2134 = vunpack.c.l.b16 %v1400
    %v2135 = vunpack.c.h.b16 %v1400
    %v2136 = vunpack.c.l.b16 %v1401
    %v2137 = vunpack.c.l.b16 %v1402
    %v2138 = vunpack.c.h.b16 %v1402
    %v2139 = vunpack.c.l.b16 %v1403
    %v2140 = vunpack.c.h.b16 %v1403
    %v2141 = vunpack.c.l.b16 %v1404
    %v2142 = vunpack.c.h.b16 %v1404
    %v2143 = vunpack.c.l.b16 %v1405
    %v2144 = vunpack.c.l.b16 %v1406
    %v2145 = vunpack.c.h.b16 %v1406
    %v2146 = vunpack.c.l.b16 %v1407
    %v2147 = vunpack.c.h.b16 %v1407
    %v2148 = vunpack.c.l.b16 %v1408
    %v2149 = vunpack.c.h.b16 %v1408
    %v2150 = vunpack.c.l.b16 %v1409
    %v2151 = vpack.c.b16 %v1710, %v1703
    %v2152 = vpack.c.b16 %v1711, %v1704
    %v2153 = vpack.c.b16 %v1712, %v1705
    %v2154 = vpack.c.b16 %v1713, %v1706
    %v2155 = vpack.c.b16 %v1714, %v1707
    %v2156 = vpack.c.b16 %v1715, %v1708
    %v2157 = vpack.c.b16 %v1716, %v1709
    %v2158 = vpack.c.b16 %v1724, %v1717
    %v2159 = vpack.c.b16 %v1725, %v1718
    %v2160 = vpack.c.b16 %v1726, %v1719
    %v2161 = vpack.c.b16 %v1727, %v1720
    %v2162 = vpack.c.b16 %v1728, %v1721
    %v2163 = vpack.c.b16 %v1729, %v1722
    %v2164 = vpack.c.b16 %v1730, %v1723
    %v2165 = vpack.c.b16 %v1738, %v1731
    %v2166 = vpack.c.b16 %v1739, %v1732
    %v2167 = vpack.c.b16 %v1740, %v1733
    %v2168 = vpack.c.b16 %v1741, %v1734
    %v2169 = vpack.c.b16 %v1742, %v1735
    %v2170 = vpack.c.b16 %v1743, %v1736
    %v2171 = vpack.c.b16 %v1744, %v1737
    %v2172 = vpack.c.b16 %v1752, %v1745
    %v2173 = vpack.c.b16 %v1753, %v1746
    %v2174 = vpack.c.b16 %v1754, %v1747
    %v2175 = vpack.c.b16 %v1755, %v1748
    %v2176 = vpack.c.b16 %v1756, %v1749
    %v2177 = vpack.c.b16 %v1757, %v1750
    %v2178 = vpack.c.b16 %v1758, %v1751
    %v2179 = vpack.c.b16 %v1766, %v1759
    %v2180 = vpack.c.b16 %v1767, %v1760
    %v2181 = vpack.c.b16 %v1768, %v1761
    %v2182 = vpack.c.b16 %v1769, %v1762
    %v2183 = vpack.c.b16 %v1770, %v1763
    %v2184 = vpack.c.b16 %v1771, %v1764
    %v2185 = vpack.c.b16 %v1772, %v1765
    %v2186 = vpack.c.b16 %v1780, %v1773
    %v2187 = vpack.c.b16 %v1781, %v1774
    %v2188 = vpack.c.b16 %v1782, %v1775
    %v2189 = vpack.c.b16 %v1783, %v1776
    %v2190 = vpack.c.b16 %v1784, %v1777
    %v2191 = vpack.c.b16 %v1785, %v1778
    %v2192 = vpack.c.b16 %v1786, %v1779
    %v2193 = vpack.c.b16 %v1794, %v1787
    %v2194 = vpack.c.b16 %v1795, %v1788
    %v2195 = vpack.c.b16 %v1796, %v1789
    %v2196 = vpack.c.b16 %v1797, %v1790
    %v2197 = vpack.c.b16 %v1798, %v1791
    %v2198 = vpack.c.b16 %v1799, %v1792
    %v2199 = vpack.c.b16 %v1800, %v1793
    %v2200 = vpack.c.b16 %v1808, %v1801
    %v2201 = vpack.c.b16 %v1809, %v1802
    %v2202 = vpack.c.b16 %v1810, %v1803
    %v2203 = vpack.c.b16 %v1811, %v1804
    %v2204 = vpack.c.b16 %v1812, %v1805
    %v2205 = vpack.c.b16 %v1813, %v1806
    %v2206 = vpack.c.b16 %v1814, %v1807
    %v2207 = vpack.c.b16 %v1822, %v1815
    %v2208 = vpack.c.b16 %v1823, %v1816
    %v2209 = vpack.c.b16 %v1824, %v1817
    %v2210 = vpack.c.b16 %v1825, %v1818
    %v2211 = vpack.c.b16 %v1826, %v1819
    %v2212 = vpack.c.b16 %v1827, %v1820
    %v2213 = vpack.c.b16 %v1828, %v1821
    %v2214 = vpack.c.b16 %v1836, %v1829
    %v2215 = vpack.c.b16 %v1837, %v1830
    %v2216 = vpack.c.b16 %v1838, %v1831
    %v2217 = vpack.c.b16 %v1839, %v1832
    %v2218 = vpack.c.b16 %v1840, %v1833
    %v2219 = vpack.c.b16 %v1841, %v1834
    %v2220 = vpack.c.b16 %v1842, %v1835
    %v2221 = vpack.c.b16 %v1850, %v1843
    %v2222 = vpack.c.b16 %v1851, %v1844
    %v2223 = vpack.c.b16 %v1852, %v1845
    %v2224 = vpack.c.b16 %v1853, %v1846
    %v2225 = vpack.c.b16 %v1854, %v1847
    %v2226 = vpack.c.b16 %v1855, %v1848
    %v2227 = vpack.c.b16 %v1856, %v1849
    %v2228 = vpack.c.b16 %v1864, %v1857
    %v2229 = vpack.c.b16 %v1865, %v1858
    %v2230 = vpack.c.b16 %v1866, %v1859
    %v2231 = vpack.c.b16 %v1867, %v1860
    %v2232 = vpack.c.b16 %v1868, %v1861
    %v2233 = vpack.c.b16 %v1869, %v1862
    %v2234 = vpack.c.b16 %v1870, %v1863
    %v2235 = vpack.c.b16 %v1878, %v1871
    %v2236 = vpack.c.b16 %v1879, %v1872
    %v2237 = vpack.c.b16 %v1880, %v1873
    %v2238 = vpack.c.b16 %v1881, %v1874
    %v2239 = vpack.c.b16 %v1882, %v1875
    %v2240 = vpack.c.b16 %v1883, %v1876
    %v2241 = vpack.c.b16 %v1884, %v1877
    %v2242 = vpack.c.b16 %v1892, %v1885
    %v2243 = vpack.c.b16 %v1893, %v1886
    %v2244 = vpack.c.b16 %v1894, %v1887
    %v2245 = vpack.c.b16 %v1895, %v1888
    %v2246 = vpack.c.b16 %v1896, %v1889
    %v2247 = vpack.c.b16 %v1897, %v1890
    %v2248 = vpack.c.b16 %v1898, %v1891
    %v2249 = vpack.c.b16 %v1906, %v1899
    %v2250 = vpack.c.b16 %v1907, %v1900
    %v2251 = vpack.c.b16 %v1908, %v1901
    %v2252 = vpack.c.b16 %v1909, %v1902
    %v2253 = vpack.c.b16 %v1910, %v1903
    %v2254 = vpack.c.b16 %v1911, %v1904
    %v2255 = vpack.c.b16 %v1912, %v1905
    %v2256 = vpack.c.b16 %v1920, %v1913
    %v2257 = vpack.c.b16 %v1921, %v1914
    %v2258 = vpack.c.b16 %v1922, %v1915
    %v2259 = vpack.c.b16 %v1923, %v1916
    %v2260 = vpack.c.b16 %v1924, %v1917
    %v2261 = vpack.c.b16 %v1925, %v1918
    %v2262 = vpack.c.b16 %v1926, %v1919
    %v2263 = vpack.c.b16 %v1934, %v1927
    %v2264 = vpack.c.b16 %v1935, %v1928
    %v2265 = vpack.c.b16 %v1936, %v1929
    %v2266 = vpack.c.b16 %v1937, %v1930
    %v2267 = vpack.c.b16 %v1938, %v1931
    %v2268 = vpack.c.b16 %v1939, %v1932
    %v2269 = vpack.c.b16 %v1940, %v1933
    %v2270 = vpack.c.b16 %v1948, %v1941
    %v2271 = vpack.c.b16 %v1949, %v1942
    %v2272 = vpack.c.b16 %v1950, %v1943
    %v2273 = vpack.c.b16 %v1951, %v1944
    %v2274 = vpack.c.b16 %v1952, %v1945
    %v2275 = vpack.c.b16 %v1953, %v1946
    %v2276 = vpack.c.b16 %v1954, %v1947
    %v2277 = vpack.c.b16 %v1962, %v1955
    %v2278 = vpack.c.b16 %v1963, %v1956
    %v2279 = vpack.c.b16 %v1964, %v1957
    %v2280 = vpack.c.b16 %v1965, %v1958
    %v2281 = vpack.c.b16 %v1966, %v1959
    %v2282 = vpack.c.b16 %v1967, %v1960
    %v2283 = vpack.c.b16 %v1968, %v1961
    %v2284 = vpack.c.b16 %v1976, %v1969
    %v2285 = vpack.c.b16 %v1977, %v1970
    %v2286 = vpack.c.b16 %v1978, %v1971
    %v2287 = vpack.c.b16 %v1979, %v1972
    %v2288 = vpack.c.b16 %v1980, %v1973
    %v2289 = vpack.c.b16 %v1981, %v1974
    %v2290 = vpack.c.b16 %v1982, %v1975
    %v2291 = vpack.c.b16 %v1990, %v1983
    %v2292 = vpack.c.b16 %v1991, %v1984
    %v2293 = vpack.c.b16 %v1992, %v1985
    %v2294 = vpack.c.b16 %v1993, %v1986
    %v2295 = vpack.c.b16 %v1994, %v1987
    %v2296 = vpack.c.b16 %v1995, %v1988
    %v2297 = vpack.c.b16 %v1996, %v1989
    %v2298 = vpack.c.b16 %v2004, %v1997
    %v2299 = vpack.c.b16 %v2005, %v1998
    %v2300 = vpack.c.b16 %v2006, %v1999
    %v2301 = vpack.c.b16 %v2007, %v2000
    %v2302 = vpack.c.b16 %v2008, %v2001
    %v2303 = vpack.c.b16 %v2009, %v2002
    %v2304 = vpack.c.b16 %v2010, %v2003
    %v2305 = vpack.c.b16 %v2018, %v2011
    %v2306 = vpack.c.b16 %v2019, %v2012
    %v2307 = vpack.c.b16 %v2020, %v2013
    %v2308 = vpack.c.b16 %v2021, %v2014
    %v2309 = vpack.c.b16 %v2022, %v2015
    %v2310 = vpack.c.b16 %v2023, %v2016
    %v2311 = vpack.c.b16 %v2024, %v2017
    %v2312 = vpack.c.b16 %v2032, %v2025
    %v2313 = vpack.c.b16 %v2033, %v2026
    %v2314 = vpack.c.b16 %v2034, %v2027
    %v2315 = vpack.c.b16 %v2035, %v2028
    %v2316 = vpack.c.b16 %v2036, %v2029
    %v2317 = vpack.c.b16 %v2037, %v2030
    %v2318 = vpack.c.b16 %v2038, %v2031
    %v2319 = vpack.c.b16 %v2046, %v2039
    %v2320 = vpack.c.b16 %v2047, %v2040
    %v2321 = vpack.c.b16 %v2048, %v2041
    %v2322 = vpack.c.b16 %v2049, %v2042
    %v2323 = vpack.c.b16 %v2050, %v2043
    %v2324 = vpack.c.b16 %v2051, %v2044
    %v2325 = vpack.c.b16 %v2052, %v2045
    %v2326 = vpack.c.b16 %v2060, %v2053
    %v2327 = vpack.c.b16 %v2061, %v2054
    %v2328 = vpack.c.b16 %v2062, %v2055
    %v2329 = vpack.c.b16 %v2063, %v2056
    %v2330 = vpack.c.b16 %v2064, %v2057
    %v2331 = vpack.c.b16 %v2065, %v2058
    %v2332 = vpack.c.b16 %v2066, %v2059
    %v2333 = vpack.c.b16 %v2074, %v2067
    %v2334 = vpack.c.b16 %v2075, %v2068
    %v2335 = vpack.c.b16 %v2076, %v2069
    %v2336 = vpack.c.b16 %v2077, %v2070
    %v2337 = vpack.c.b16 %v2078, %v2071
    %v2338 = vpack.c.b16 %v2079, %v2072
    %v2339 = vpack.c.b16 %v2080, %v2073
    %v2340 = vpack.c.b16 %v2088, %v2081
    %v2341 = vpack.c.b16 %v2089, %v2082
    %v2342 = vpack.c.b16 %v2090, %v2083
    %v2343 = vpack.c.b16 %v2091, %v2084
    %v2344 = vpack.c.b16 %v2092, %v2085
    %v2345 = vpack.c.b16 %v2093, %v2086
    %v2346 = vpack.c.b16 %v2094, %v2087
    %v2347 = vpack.c.b16 %v2102, %v2095
    %v2348 = vpack.c.b16 %v2103, %v2096
    %v2349 = vpack.c.b16 %v2104, %v2097
    %v2350 = vpack.c.b16 %v2105, %v2098
    %v2351 = vpack.c.b16 %v2106, %v2099
    %v2352 = vpack.c.b16 %v2107, %v2100
    %v2353 = vpack.c.b16 %v2108, %v2101
    %v2354 = vpack.c.b16 %v2116, %v2109
    %v2355 = vpack.c.b16 %v2117, %v2110
    %v2356 = vpack.c.b16 %v2118, %v2111
    %v2357 = vpack.c.b16 %v2119, %v2112
    %v2358 = vpack.c.b16 %v2120, %v2113
    %v2359 = vpack.c.b16 %v2121, %v2114
    %v2360 = vpack.c.b16 %v2122, %v2115
    %v2361 = vpack.c.b16 %v2130, %v2123
    %v2362 = vpack.c.b16 %v2131, %v2124
    %v2363 = vpack.c.b16 %v2132, %v2125
    %v2364 = vpack.c.b16 %v2133, %v2126
    %v2365 = vpack.c.b16 %v2134, %v2127
    %v2366 = vpack.c.b16 %v2135, %v2128
    %v2367 = vpack.c.b16 %v2136, %v2129
    %v2368 = vpack.c.b16 %v2144, %v2137
    %v2369 = vpack.c.b16 %v2145, %v2138
    %v2370 = vpack.c.b16 %v2146, %v2139
    %v2371 = vpack.c.b16 %v2147, %v2140
    %v2372 = vpack.c.b16 %v2148, %v2141
    %v2373 = vpack.c.b16 %v2149, %v2142
    %v2374 = vpack.c.b16 %v2150, %v2143
    %2599 = vmatprep.subr.bf16.mxu0 %v2152
    %2600 = vmatpush1.bf16.msra.mxu0 %v2151
    %2601 = vmatprep.subr.bf16.mxu0 %v2159
    %2602 = vmatpush1.bf16.msra.mxu0 %v2158
    %2603 = vmatprep.subr.bf16.mxu0 %v2166
    %2604 = vmatpush1.bf16.msra.mxu0 %v2165
    %2605 = vmatprep.subr.bf16.mxu0 %v2173
    %2606 = vmatpush1.bf16.msra.mxu0 %v2172
    %2607 = vmatprep.subr.bf16.mxu0 %v2180
    %2608 = vmatpush1.bf16.msra.mxu0 %v2179
    %2609 = vmatprep.subr.bf16.mxu0 %v2187
    %2610 = vmatpush1.bf16.msra.mxu0 %v2186
    %2611 = vmatprep.subr.bf16.mxu0 %v2194
    %2612 = vmatpush1.bf16.msra.mxu0 %v2193
    %2613 = vmatprep.subr.bf16.mxu0 %v2201
    %2614 = vmatpush1.bf16.msra.mxu0 %v2200
    %2615 = vmatprep.subr.bf16.mxu0 %v2208
    %2616 = vmatpush1.bf16.msra.mxu0 %v2207
    %2617 = vmatprep.subr.bf16.mxu0 %v2215
    %2618 = vmatpush1.bf16.msra.mxu0 %v2214
    %2619 = vmatprep.subr.bf16.mxu0 %v2222
    %2620 = vmatpush1.bf16.msra.mxu0 %v2221
    %2621 = vmatprep.subr.bf16.mxu0 %v2229
    %2622 = vmatpush1.bf16.msra.mxu0 %v2228
    %2623 = vmatprep.subr.bf16.mxu0 %v2236
    %2624 = vmatpush1.bf16.msra.mxu0 %v2235
    %2625 = vmatprep.subr.bf16.mxu0 %v2243
    %2626 = vmatpush1.bf16.msra.mxu0 %v2242
    %2627 = vmatprep.subr.bf16.mxu0 %v2250
    %2628 = vmatpush1.bf16.msra.mxu0 %v2249
    %2629 = vmatprep.subr.bf16.mxu0 %v2257
    %2630 = vmatpush1.bf16.msra.mxu0 %v2256
    %2631 = vmatprep.mubr.bf16.mxu0 %v1151
    %2632 = vmatmul.mubr.bf16.gmra.mrb[0].mxu0 %v1150
    %v2633 = vpop.f32.mrb[0].mxu0
    %v2634 = vadd.f32 %v1415, %v2633
    %v2635 = vpop.f32.mrb[0].mxu0
    %v2636 = vadd.f32 %v1419, %v2635
    %v2637 = vpop.f32.mrb[0].mxu0
    %v2638 = vadd.f32 %v1415, %v2637
    %v2639 = vpop.f32.mrb[0].mxu0
    %v2640 = vadd.f32 %v1419, %v2639
    %2641 = vdwg.mxu0
    %2642 = vmatprep.subr.bf16.mxu0 %v2264
    %2643 = vmatpush1.bf16.msra.mxu0 %v2263
    %2644 = vmatprep.subr.bf16.mxu0 %v2271
    %2645 = vmatpush1.bf16.msra.mxu0 %v2270
    %2646 = vmatprep.subr.bf16.mxu0 %v2278
    %2647 = vmatpush1.bf16.msra.mxu0 %v2277
    %2648 = vmatprep.subr.bf16.mxu0 %v2285
    %2649 = vmatpush1.bf16.msra.mxu0 %v2284
    %2650 = vmatprep.subr.bf16.mxu0 %v2292
    %2651 = vmatpush1.bf16.msra.mxu0 %v2291
    %2652 = vmatprep.subr.bf16.mxu0 %v2299
    %2653 = vmatpush1.bf16.msra.mxu0 %v2298
    %2654 = vmatprep.subr.bf16.mxu0 %v2306
    %2655 = vmatpush1.bf16.msra.mxu0 %v2305
    %2656 = vmatprep.subr.bf16.mxu0 %v2313
    %2657 = vmatpush1.bf16.msra.mxu0 %v2312
    %2658 = vmatprep.subr.bf16.mxu0 %v2320
    %2659 = vmatpush1.bf16.msra.mxu0 %v2319
    %2660 = vmatprep.subr.bf16.mxu0 %v2327
    %2661 = vmatpush1.bf16.msra.mxu0 %v2326
    %2662 = vmatprep.subr.bf16.mxu0 %v2334
    %2663 = vmatpush1.bf16.msra.mxu0 %v2333
    %2664 = vmatprep.subr.bf16.mxu0 %v2341
    %2665 = vmatpush1.bf16.msra.mxu0 %v2340
    %2666 = vmatprep.subr.bf16.mxu0 %v2348
    %2667 = vmatpush1.bf16.msra.mxu0 %v2347
    %2668 = vmatprep.subr.bf16.mxu0 %v2355
    %2669 = vmatpush1.bf16.msra.mxu0 %v2354
    %2670 = vmatprep.subr.bf16.mxu0 %v2362
    %2671 = vmatpush1.bf16.msra.mxu0 %v2361
    %2672 = vmatprep.subr.bf16.mxu0 %v2369
    %2673 = vmatpush1.bf16.msra.mxu0 %v2368
    %2674 = vmatprep.mubr.bf16.mxu0 %v1153
    %2675 = vmatmul.mubr.bf16.gmra.mrb[0].mxu0 %v1152
    %v2676 = vpop.f32.mrb[0].mxu0
    %v2677 = vadd.f32 %v2634, %v2676
    %v2678 = vpop.f32.mrb[0].mxu0
    %v2679 = vadd.f32 %v2636, %v2678
    %v2680 = vpop.f32.mrb[0].mxu0
    %v2681 = vadd.f32 %v2638, %v2680
    %v2682 = vpop.f32.mrb[0].mxu0
    %v2683 = vadd.f32 %v2640, %v2682
    %2684 = vdwg.mxu0
    %2685 = vmatprep.subr.bf16.mxu0 %v2154
    %2686 = vmatpush1.bf16.msra.mxu0 %v2153
    %2687 = vmatprep.subr.bf16.mxu0 %v2161
    %2688 = vmatpush1.bf16.msra.mxu0 %v2160
    %2689 = vmatprep.subr.bf16.mxu0 %v2168
    %2690 = vmatpush1.bf16.msra.mxu0 %v2167
    %2691 = vmatprep.subr.bf16.mxu0 %v2175
    %2692 = vmatpush1.bf16.msra.mxu0 %v2174
    %2693 = vmatprep.subr.bf16.mxu0 %v2182
    %2694 = vmatpush1.bf16.msra.mxu0 %v2181
    %2695 = vmatprep.subr.bf16.mxu0 %v2189
    %2696 = vmatpush1.bf16.msra.mxu0 %v2188
    %2697 = vmatprep.subr.bf16.mxu0 %v2196
    %2698 = vmatpush1.bf16.msra.mxu0 %v2195
    %2699 = vmatprep.subr.bf16.mxu0 %v2203
    %2700 = vmatpush1.bf16.msra.mxu0 %v2202
    %2701 = vmatprep.subr.bf16.mxu0 %v2210
    %2702 = vmatpush1.bf16.msra.mxu0 %v2209
    %2703 = vmatprep.subr.bf16.mxu0 %v2217
    %2704 = vmatpush1.bf16.msra.mxu0 %v2216
    %2705 = vmatprep.subr.bf16.mxu0 %v2224
    %2706 = vmatpush1.bf16.msra.mxu0 %v2223
    %2707 = vmatprep.subr.bf16.mxu0 %v2231
    %2708 = vmatpush1.bf16.msra.mxu0 %v2230
    %2709 = vmatprep.subr.bf16.mxu0 %v2238
    %2710 = vmatpush1.bf16.msra.mxu0 %v2237
    %2711 = vmatprep.subr.bf16.mxu0 %v2245
    %2712 = vmatpush1.bf16.msra.mxu0 %v2244
    %2713 = vmatprep.subr.bf16.mxu0 %v2252
    %2714 = vmatpush1.bf16.msra.mxu0 %v2251
    %2715 = vmatprep.subr.bf16.mxu0 %v2259
    %2716 = vmatpush1.bf16.msra.mxu0 %v2258
    %2717 = vmatprep.mubr.bf16.mxu0 %v1151
    %2718 = vmatmul.mubr.bf16.gmra.mrb[0].mxu0 %v1150
    %v2719 = vpop.f32.mrb[0].mxu0
    %v2720 = vadd.f32 %v1423, %v2719
    %v2721 = vpop.f32.mrb[0].mxu0
    %v2722 = vadd.f32 %v1427, %v2721
    %v2723 = vpop.f32.mrb[0].mxu0
    %v2724 = vadd.f32 %v1423, %v2723
    %v2725 = vpop.f32.mrb[0].mxu0
    %v2726 = vadd.f32 %v1427, %v2725
    %2727 = vdwg.mxu0
    %2728 = vmatprep.subr.bf16.mxu0 %v2266
    %2729 = vmatpush1.bf16.msra.mxu0 %v2265
    %2730 = vmatprep.subr.bf16.mxu0 %v2273
    %2731 = vmatpush1.bf16.msra.mxu0 %v2272
    %2732 = vmatprep.subr.bf16.mxu0 %v2280
    %2733 = vmatpush1.bf16.msra.mxu0 %v2279
    %2734 = vmatprep.subr.bf16.mxu0 %v2287
    %2735 = vmatpush1.bf16.msra.mxu0 %v2286
    %2736 = vmatprep.subr.bf16.mxu0 %v2294
    %2737 = vmatpush1.bf16.msra.mxu0 %v2293
    %2738 = vmatprep.subr.bf16.mxu0 %v2301
    %2739 = vmatpush1.bf16.msra.mxu0 %v2300
    %2740 = vmatprep.subr.bf16.mxu0 %v2308
    %2741 = vmatpush1.bf16.msra.mxu0 %v2307
    %2742 = vmatprep.subr.bf16.mxu0 %v2315
    %2743 = vmatpush1.bf16.msra.mxu0 %v2314
    %2744 = vmatprep.subr.bf16.mxu0 %v2322
    %2745 = vmatpush1.bf16.msra.mxu0 %v2321
    %2746 = vmatprep.subr.bf16.mxu0 %v2329
    %2747 = vmatpush1.bf16.msra.mxu0 %v2328
    %2748 = vmatprep.subr.bf16.mxu0 %v2336
    %2749 = vmatpush1.bf16.msra.mxu0 %v2335
    %2750 = vmatprep.subr.bf16.mxu0 %v2343
    %2751 = vmatpush1.bf16.msra.mxu0 %v2342
    %2752 = vmatprep.subr.bf16.mxu0 %v2350
    %2753 = vmatpush1.bf16.msra.mxu0 %v2349
    %2754 = vmatprep.subr.bf16.mxu0 %v2357
    %2755 = vmatpush1.bf16.msra.mxu0 %v2356
    %2756 = vmatprep.subr.bf16.mxu0 %v2364
    %2757 = vmatpush1.bf16.msra.mxu0 %v2363
    %2758 = vmatprep.subr.bf16.mxu0 %v2371
    %2759 = vmatpush1.bf16.msra.mxu0 %v2370
    %2760 = vmatprep.mubr.bf16.mxu0 %v1153
    %2761 = vmatmul.mubr.bf16.gmra.mrb[0].mxu0 %v1152
    %v2762 = vpop.f32.mrb[0].mxu0
    %v2763 = vadd.f32 %v2720, %v2762
    %v2764 = vpop.f32.mrb[0].mxu0
    %v2765 = vadd.f32 %v2722, %v2764
    %v2766 = vpop.f32.mrb[0].mxu0
    %v2767 = vadd.f32 %v2724, %v2766
    %v2768 = vpop.f32.mrb[0].mxu0
    %v2769 = vadd.f32 %v2726, %v2768
    %2770 = vdwg.mxu0
    %2771 = vmatprep.subr.bf16.mxu0 %v2156
    %2772 = vmatpush1.bf16.msra.mxu0 %v2155
    %2773 = vmatprep.subr.bf16.mxu0 %v2163
    %2774 = vmatpush1.bf16.msra.mxu0 %v2162
    %2775 = vmatprep.subr.bf16.mxu0 %v2170
    %2776 = vmatpush1.bf16.msra.mxu0 %v2169
    %2777 = vmatprep.subr.bf16.mxu0 %v2177
    %2778 = vmatpush1.bf16.msra.mxu0 %v2176
    %2779 = vmatprep.subr.bf16.mxu0 %v2184
    %2780 = vmatpush1.bf16.msra.mxu0 %v2183
    %2781 = vmatprep.subr.bf16.mxu0 %v2191
    %2782 = vmatpush1.bf16.msra.mxu0 %v2190
    %2783 = vmatprep.subr.bf16.mxu0 %v2198
    %2784 = vmatpush1.bf16.msra.mxu0 %v2197
    %2785 = vmatprep.subr.bf16.mxu0 %v2205
    %2786 = vmatpush1.bf16.msra.mxu0 %v2204
    %2787 = vmatprep.subr.bf16.mxu0 %v2212
    %2788 = vmatpush1.bf16.msra.mxu0 %v2211
    %2789 = vmatprep.subr.bf16.mxu0 %v2219
    %2790 = vmatpush1.bf16.msra.mxu0 %v2218
    %2791 = vmatprep.subr.bf16.mxu0 %v2226
    %2792 = vmatpush1.bf16.msra.mxu0 %v2225
    %2793 = vmatprep.subr.bf16.mxu0 %v2233
    %2794 = vmatpush1.bf16.msra.mxu0 %v2232
    %2795 = vmatprep.subr.bf16.mxu0 %v2240
    %2796 = vmatpush1.bf16.msra.mxu0 %v2239
    %2797 = vmatprep.subr.bf16.mxu0 %v2247
    %2798 = vmatpush1.bf16.msra.mxu0 %v2246
    %2799 = vmatprep.subr.bf16.mxu0 %v2254
    %2800 = vmatpush1.bf16.msra.mxu0 %v2253
    %2801 = vmatprep.subr.bf16.mxu0 %v2261
    %2802 = vmatpush1.bf16.msra.mxu0 %v2260
    %2803 = vmatprep.mubr.bf16.mxu0 %v1151
    %2804 = vmatmul.mubr.bf16.gmra.mrb[0].mxu0 %v1150
    %v2805 = vpop.f32.mrb[0].mxu0
    %v2806 = vadd.f32 %v1431, %v2805
    %v2807 = vpop.f32.mrb[0].mxu0
    %v2808 = vadd.f32 %v1435, %v2807
    %v2809 = vpop.f32.mrb[0].mxu0
    %v2810 = vadd.f32 %v1431, %v2809
    %v2811 = vpop.f32.mrb[0].mxu0
    %v2812 = vadd.f32 %v1435, %v2811
    %2813 = vdwg.mxu0
    %2814 = vmatprep.subr.bf16.mxu0 %v2268
    %2815 = vmatpush1.bf16.msra.mxu0 %v2267
    %2816 = vmatprep.subr.bf16.mxu0 %v2275
    %2817 = vmatpush1.bf16.msra.mxu0 %v2274
    %2818 = vmatprep.subr.bf16.mxu0 %v2282
    %2819 = vmatpush1.bf16.msra.mxu0 %v2281
    %2820 = vmatprep.subr.bf16.mxu0 %v2289
    %2821 = vmatpush1.bf16.msra.mxu0 %v2288
    %2822 = vmatprep.subr.bf16.mxu0 %v2296
    %2823 = vmatpush1.bf16.msra.mxu0 %v2295
    %2824 = vmatprep.subr.bf16.mxu0 %v2303
    %2825 = vmatpush1.bf16.msra.mxu0 %v2302
    %2826 = vmatprep.subr.bf16.mxu0 %v2310
    %2827 = vmatpush1.bf16.msra.mxu0 %v2309
    %2828 = vmatprep.subr.bf16.mxu0 %v2317
    %2829 = vmatpush1.bf16.msra.mxu0 %v2316
    %2830 = vmatprep.subr.bf16.mxu0 %v2324
    %2831 = vmatpush1.bf16.msra.mxu0 %v2323
    %2832 = vmatprep.subr.bf16.mxu0 %v2331
    %2833 = vmatpush1.bf16.msra.mxu0 %v2330
    %2834 = vmatprep.subr.bf16.mxu0 %v2338
    %2835 = vmatpush1.bf16.msra.mxu0 %v2337
    %2836 = vmatprep.subr.bf16.mxu0 %v2345
    %2837 = vmatpush1.bf16.msra.mxu0 %v2344
    %2838 = vmatprep.subr.bf16.mxu0 %v2352
    %2839 = vmatpush1.bf16.msra.mxu0 %v2351
    %2840 = vmatprep.subr.bf16.mxu0 %v2359
    %2841 = vmatpush1.bf16.msra.mxu0 %v2358
    %2842 = vmatprep.subr.bf16.mxu0 %v2366
    %2843 = vmatpush1.bf16.msra.mxu0 %v2365
    %2844 = vmatprep.subr.bf16.mxu0 %v2373
    %2845 = vmatpush1.bf16.msra.mxu0 %v2372
    %2846 = vmatprep.mubr.bf16.mxu0 %v1153
    %2847 = vmatmul.mubr.bf16.gmra.mrb[0].mxu0 %v1152
    %v2848 = vpop.f32.mrb[0].mxu0
    %v2849 = vadd.f32 %v2806, %v2848
    %v2850 = vpop.f32.mrb[0].mxu0
    %v2851 = vadd.f32 %v2808, %v2850
    %v2852 = vpop.f32.mrb[0].mxu0
    %v2853 = vadd.f32 %v2810, %v2852
    %v2854 = vpop.f32.mrb[0].mxu0
    %v2855 = vadd.f32 %v2812, %v2854
    %2856 = vdwg.mxu0
    %2857 = vmatprep.subr.bf16.mxu0 0
    %2858 = vmatpush1.bf16.msra.mxu0 %v2157
    %2859 = vmatprep.subr.bf16.mxu0 0
    %2860 = vmatpush1.bf16.msra.mxu0 %v2164
    %2861 = vmatprep.subr.bf16.mxu0 0
    %2862 = vmatpush1.bf16.msra.mxu0 %v2171
    %2863 = vmatprep.subr.bf16.mxu0 0
    %2864 = vmatpush1.bf16.msra.mxu0 %v2178
    %2865 = vmatprep.subr.bf16.mxu0 0
    %2866 = vmatpush1.bf16.msra.mxu0 %v2185
    %2867 = vmatprep.subr.bf16.mxu0 0
    %2868 = vmatpush1.bf16.msra.mxu0 %v2192
    %2869 = vmatprep.subr.bf16.mxu0 0
    %2870 = vmatpush1.bf16.msra.mxu0 %v2199
    %2871 = vmatprep.subr.bf16.mxu0 0
    %2872 = vmatpush1.bf16.msra.mxu0 %v2206
    %2873 = vmatprep.subr.bf16.mxu0 0
    %2874 = vmatpush1.bf16.msra.mxu0 %v2213
    %2875 = vmatprep.subr.bf16.mxu0 0
    %2876 = vmatpush1.bf16.msra.mxu0 %v2220
    %2877 = vmatprep.subr.bf16.mxu0 0
    %2878 = vmatpush1.bf16.msra.mxu0 %v2227
    %2879 = vmatprep.subr.bf16.mxu0 0
    %2880 = vmatpush1.bf16.msra.mxu0 %v2234
    %2881 = vmatprep.subr.bf16.mxu0 0
    %2882 = vmatpush1.bf16.msra.mxu0 %v2241
    %2883 = vmatprep.subr.bf16.mxu0 0
    %2884 = vmatpush1.bf16.msra.mxu0 %v2248
    %2885 = vmatprep.subr.bf16.mxu0 0
    %2886 = vmatpush1.bf16.msra.mxu0 %v2255
    %2887 = vmatprep.subr.bf16.mxu0 0
    %2888 = vmatpush1.bf16.msra.mxu0 %v2262
    %2889 = vmatprep.mubr.bf16.mxu0 %v1151
    %2890 = vmatmul.mubr.bf16.gmra.mrb[0].mxu0 %v1150
    %v2891 = vpop.f32.mrb[0].mxu0
    %v2892 = vadd.f32 %v1439, %v2891
    %v2893 = vpop.f32.mrb[0].mxu0
    %v2894 = vpop.f32.mrb[0].mxu0
    %v2895 = vadd.f32 %v1439, %v2894
    %v2896 = vpop.f32.mrb[0].mxu0
    %2897 = vdwg.mxu0
    %2898 = vmatprep.subr.bf16.mxu0 0
    %2899 = vmatpush1.bf16.msra.mxu0 %v2269
    %2900 = vmatprep.subr.bf16.mxu0 0
    %2901 = vmatpush1.bf16.msra.mxu0 %v2276
    %2902 = vmatprep.subr.bf16.mxu0 0
    %2903 = vmatpush1.bf16.msra.mxu0 %v2283
    %2904 = vmatprep.subr.bf16.mxu0 0
    %2905 = vmatpush1.bf16.msra.mxu0 %v2290
    %2906 = vmatprep.subr.bf16.mxu0 0
    %2907 = vmatpush1.bf16.msra.mxu0 %v2297
    %2908 = vmatprep.subr.bf16.mxu0 0
    %2909 = vmatpush1.bf16.msra.mxu0 %v2304
    %2910 = vmatprep.subr.bf16.mxu0 0
    %2911 = vmatpush1.bf16.msra.mxu0 %v2311
    %2912 = vmatprep.subr.bf16.mxu0 0
    %2913 = vmatpush1.bf16.msra.mxu0 %v2318
    %2914 = vmatprep.subr.bf16.mxu0 0
    %2915 = vmatpush1.bf16.msra.mxu0 %v2325
    %2916 = vmatprep.subr.bf16.mxu0 0
    %2917 = vmatpush1.bf16.msra.mxu0 %v2332
    %2918 = vmatprep.subr.bf16.mxu0 0
    %2919 = vmatpush1.bf16.msra.mxu0 %v2339
    %2920 = vmatprep.subr.bf16.mxu0 0
    %2921 = vmatpush1.bf16.msra.mxu0 %v2346
    %2922 = vmatprep.subr.bf16.mxu0 0
    %2923 = vmatpush1.bf16.msra.mxu0 %v2353
    %2924 = vmatprep.subr.bf16.mxu0 0
    %2925 = vmatpush1.bf16.msra.mxu0 %v2360
    %2926 = vmatprep.subr.bf16.mxu0 0
    %2927 = vmatpush1.bf16.msra.mxu0 %v2367
    %2928 = vmatprep.subr.bf16.mxu0 0
    %2929 = vmatpush1.bf16.msra.mxu0 %v2374
    %2930 = vmatprep.mubr.bf16.mxu0 %v1153
    %2931 = vmatmul.mubr.bf16.gmra.mrb[0].mxu0 %v1152
    %v2932 = vpop.f32.mrb[0].mxu0
    %v2933 = vadd.f32 %v2892, %v2932
    %v2934 = vpop.f32.mrb[0].mxu0
    %v2935 = vpop.f32.mrb[0].mxu0
    %v2936 = vadd.f32 %v2895, %v2935
    %v2937 = vpop.f32.mrb[0].mxu0
    %2938 = vdwg.mxu0
    %2939 = vst [vmem:[#allocation2] sm:$0xff] %v2677
    %2940 = vst [vmem:[#allocation2 + $0x8] sm:$0xff] %v2679
    %2941 = vst [vmem:[#allocation2 + $0x10] sm:$0xff] %v2763
    %2942 = vst [vmem:[#allocation2 + $0x18] sm:$0xff] %v2765
    %2943 = vst [vmem:[#allocation2 + $0x20] sm:$0xff] %v2849
    %2944 = vst [vmem:[#allocation2 + $0x28] sm:$0xff] %v2851
    %vm2945 = vcmask 130048
    %2946 = vst.msk [vmem:[#allocation2 + $0x30] sm:$0xff] %vm2945, %v2933
    %2947 = vst [vmem:[#allocation2 + $0x38] sm:$0xff] %v2681
    %2948 = vst [vmem:[#allocation2 + $0x40] sm:$0xff] %v2683
    %2949 = vst [vmem:[#allocation2 + $0x48] sm:$0xff] %v2767
    %2950 = vst [vmem:[#allocation2 + $0x50] sm:$0xff] %v2769
    %2951 = vst [vmem:[#allocation2 + $0x58] sm:$0xff] %v2853
    %2952 = vst [vmem:[#allocation2 + $0x60] sm:$0xff] %v2855
    %2953 = vst.msk [vmem:[#allocation2 + $0x68] sm:$0xff] %vm2945, %v2936
    // Predicated region
    $region30: #{tpu_custom_call.1} parent=1 // pred_check
      _
    $region31: #{tpu_custom_call.1} parent=1 // pred_check_branch
      %2955 = sbr.rel (0) target = $region33
    $region32: #{tpu_custom_call.1} parent=1 // pred_region
      %s2957 = ssub.s32 1792, 1792
      %2958 = vsyncadd [#allocation3], %s2957
      %s2959 = sshll.u32 [#allocation2], 4
      %s2960 = int_to_ptr.vmem [resolvable:$true] %s2959
      %2965 = dma.vmem_to_hbm [thread:$0]  %s2960, 1792, %s7, [#allocation3], 896, 896, 56
    $region33: #{tpu_custom_call.1} parent=1 // pred_fallthru
      _
    // Predicated region
    $region34: #{tpu_custom_call.1} parent=1 // pred_check
      _
    $region35: #{tpu_custom_call.1} parent=1 // pred_check_branch
      %2967 = sbr.rel (0) target = $region37
    $region36: #{tpu_custom_call.1} parent=1 // pred_region
      %2968 = dma.done [#allocation3], 1792
    $region37: #{tpu_custom_call.1} parent=1 // pred_fallthru
      _
    %2969 = vsyncpa [#allocation3], 1

</llo_original>
